<compile_context>
chip_gen: v6e
topology: v6e:2x2x1
jax: 0.10.0
libtpu: 0.0.40
codegen_flags: <defaults>
</compile_context>

<pallas_src>
import functools

import jax
import jax.numpy as jnp
from jax.experimental import pallas as pl
from jax.experimental.pallas import tpu as pltpu


def _ceil_to(x, m):
    return ((x + m - 1) // m) * m


def _pad2(x, rows, cols):
    return jnp.pad(x, ((0, rows - x.shape[0]), (0, cols - x.shape[1])))


def _spec(block_shape, index_map, *, buffers=None):
    """BlockSpec with optional multi-buffering (compat shim if pipeline_mode is absent)."""
    if buffers is not None:
        try:
            return pl.BlockSpec(block_shape, index_map,
                                pipeline_mode=pl.Buffered(buffers))
        except (TypeError, AttributeError):
            pass
    return pl.BlockSpec(block_shape, index_map)


# ---------------------------------------------------------------------------
# Kernel
# ---------------------------------------------------------------------------
def decoder_step_kernel(
    emb_ref,       # (Bp, Ep)            bf16  embedded input token
    h_ref,         # (Bp, Hp)            f32   hidden[-1]
    c_ref,         # (Bp, Hp)            f32   cell[-1]
    enc_ref,       # (Bp, Sp, Hp)        bf16  encoder outputs
    w_attn_h_ref,  # (Hp, Hp)            bf16  attn.weight[:, :H].T
    w_attn_e_ref,  # (Hp, Hp)            bf16  attn.weight[:, H:].T
    b_attn_ref,    # (1, Hp)             f32   attn.bias
    v_ref,         # (Hp, 1)             bf16  v.weight.T
    w_lstm_ref,    # (Ep+2Hp, 4Hp)       bf16  [W_ih_emb ; W_ih_ctx ; W_hh] pre-transposed
    b_lstm_ref,    # (1, 4Hp)            f32   bias_ih + bias_hh (gate-block padded)
    fc_w_ref,      # (1, Hk, TILE_V)     bf16  fc_out.weight.T tile (contiguous, streamed)
    fc_b_ref,      # (1, TILE_V)         f32   fc_out.bias tile (streamed)
    pred_ref,      # (Bp, TILE_V)        f32   out: logits tile
    h_out_ref,     # (1, Bp, Hp)         f32   out: new hidden (per-core copy)
    c_out_ref,     # (1, Bp, Hp)         f32   out: new cell (per-core copy)
    h_bf16,        # (Bp, Hk)            bf16  scratch: new hidden, MXU-ready
    *, seq_len,
):
    f32, bf16 = jnp.float32, jnp.bfloat16
    j = pl.program_id(1)  # inner vocab-tile axis ("arbitrary"); outer axis = core split

    # Attention + LSTM state update: computed once per core (first vocab tile),
    # then carried in VMEM scratch / resident output blocks for the rest of the
    # fc_out stream. Invariant: padded H columns of h_new/c_new stay exactly 0
    # (gate zero-padding + zero c_prev/h_prev padding), so fc_w padding cannot leak.
    @pl.when(j == 0)
    def _attention_and_lstm():
        h_prev = h_ref[...]
        c_prev = c_ref[...]
        enc = enc_ref[...]
        B, S, H = enc.shape

        # ---- additive attention: energies on the MXU, f32 accumulation ----
        h_term = jnp.dot(h_prev.astype(bf16), w_attn_h_ref[...],
                         preferred_element_type=f32)                          # (B, H)
        enc_term = jnp.dot(enc.reshape(B * S, H), w_attn_e_ref[...],
                           preferred_element_type=f32).reshape(B, S, H)       # (B, S, H)
        energy = jnp.tanh(enc_term + h_term[:, None, :] + b_attn_ref[...])    # f32

        # scores[b, s] = <energy[b, s, :], v> as a single non-batched MXU dot
        scores = jnp.dot(energy.reshape(B * S, H).astype(bf16), v_ref[...],
                         preferred_element_type=f32).reshape(B, S, 1)
        if seq_len < S:  # static: mask padded source positions out of the softmax
            pos = jax.lax.broadcasted_iota(jnp.int32, (B, S, 1), 1)
            scores = jnp.where(pos < seq_len, scores, -jnp.inf)

        # softmax over the (sublane) sequence axis
        scores = scores - jnp.max(scores, axis=1, keepdims=True)
        p = jnp.exp(scores)
        attn_w = p * pl.reciprocal(jnp.sum(p, axis=1, keepdims=True), approx=True)

        # context = sum_s attn_w[b,s] * enc[b,s,:] : f32 VPU multiply + sublane sum
        context = jnp.sum(attn_w * enc.astype(f32), axis=1)                   # (B, H) f32

        # ---- single-step LSTM: one fused MXU matmul, PyTorch gate order (i,f,g,o) ----
        x = jnp.concatenate(
            [emb_ref[...], context.astype(bf16), h_prev.astype(bf16)], axis=1)
        gates = (jnp.dot(x, w_lstm_ref[...], preferred_element_type=f32)
                 + b_lstm_ref[...])                                           # (B, 4H)
        i_g = jax.nn.sigmoid(gates[:, 0 * H:1 * H])
        f_g = jax.nn.sigmoid(gates[:, 1 * H:2 * H])
        g_g = jnp.tanh(gates[:, 2 * H:3 * H])
        o_g = jax.nn.sigmoid(gates[:, 3 * H:4 * H])
        c_new = f_g * c_prev + i_g * g_g
        h_new = o_g * jnp.tanh(c_new)

        h_out_ref[...] = h_new[None]
        c_out_ref[...] = c_new[None]
        # only the first Hk columns feed the vocab matmul (rest are exact zeros)
        h_bf16[...] = h_new[:, :h_bf16.shape[1]].astype(bf16)

    # ---- vocab projection: one contiguous, lane-dense fc_out tile per grid step ----
    pred_ref[...] = (jnp.dot(h_bf16[...], fc_w_ref[0],
                             preferred_element_type=f32) + fc_b_ref[...])


# ---------------------------------------------------------------------------
# Parameters (torch-shaped raw params -> kernel layout)
# ---------------------------------------------------------------------------
def init_raw_params(key, vocab_size, embedding_dim, hidden_size):
    """Deterministic synthetic parameters with PyTorch-equivalent shapes (f32)."""
    V, E, H = vocab_size, embedding_dim, hidden_size
    ks = jax.random.split(key, 10)
    s = 0.1
    n = jax.random.normal
    return {
        "embedding": s * n(ks[0], (V, E), jnp.float32),          # nn.Embedding
        "attn_weight": s * n(ks[1], (H, 2 * H), jnp.float32),    # Linear(2H, H).weight
        "attn_bias": s * n(ks[2], (H,), jnp.float32),
        "v_weight": s * n(ks[3], (1, H), jnp.float32),           # Linear(H, 1, bias=False)
        "w_ih": s * n(ks[4], (4 * H, E + H), jnp.float32),       # lstm.weight_ih_l0
        "w_hh": s * n(ks[5], (4 * H, H), jnp.float32),           # lstm.weight_hh_l0
        "b_ih": s * n(ks[6], (4 * H,), jnp.float32),
        "b_hh": s * n(ks[7], (4 * H,), jnp.float32),
        "fc_weight": s * n(ks[8], (V, H), jnp.float32),          # Linear(H, V).weight
        "fc_bias": s * n(ks[9], (V,), jnp.float32),
    }


def prep_kernel_params(raw, *, tile_v=8192, n_cores=2):
    """Kernel-layout params: transposed, gate-block padded, bf16 weights, fc pre-tiled."""
    V, E = raw["embedding"].shape
    H = raw["w_hh"].shape[1]
    Ep, Hp = _ceil_to(E, 128), _ceil_to(H, 128)
    # fc_out contraction dim: only pad to the bf16 sublane granularity (16), not 128.
    # For H already a multiple of 128 this is a no-op; for small H it cuts the
    # dominant fc_w HBM stream (e.g. 4x at H=32).
    Hk = H if H % 128 == 0 else _ceil_to(H, 16)
    bf16, f32 = jnp.bfloat16, jnp.float32

    tile_v = max(128, min(_ceil_to(tile_v, 128), _ceil_to(V, 128)))
    n_tiles = -(-V // tile_v)
    n_cores = max(1, min(n_cores, n_tiles))
    n_tiles = _ceil_to(n_tiles, n_cores)       # even split across cores
    Vp = n_tiles * tile_v

    def gate_pad(w_t, in_dim, in_pad):
        # (in_dim, 4H) -> (in_pad, 4Hp): zero-pad each gate block separately so the
        # kernel's gates[:, k*Hp:(k+1)*Hp] slices stay lane-group aligned.
        w = w_t.reshape(in_dim, 4, H)
        w = jnp.pad(w, ((0, in_pad - in_dim), (0, 0), (0, Hp - H)))
        return w.reshape(in_pad, 4 * Hp)

    w_ih_t = raw["w_ih"].T                                  # (E+H, 4H)
    w_lstm = jnp.concatenate([
        gate_pad(w_ih_t[:E], E, Ep),                        # acts on embedded token
        gate_pad(w_ih_t[E:], H, Hp),                        # acts on attention context
        gate_pad(raw["w_hh"].T, H, Hp),                     # acts on previous hidden
    ], axis=0).astype(bf16)                                 # (Ep + 2Hp, 4Hp)

    b_lstm = (raw["b_ih"] + raw["b_hh"]).reshape(4, H)
    b_lstm = jnp.pad(b_lstm, ((0, 0), (0, Hp - H))).reshape(1, 4 * Hp).astype(f32)

    # fc_out.weight.T, padded to (Hk, Vp), then pre-tiled so each vocab tile is one
    # contiguous (Hk, tile_v) slab -> a single contiguous DMA per grid step.
    fc_w = _pad2(raw["fc_weight"].T, Hk, Vp).astype(bf16)              # (Hk, Vp)
    fc_w = fc_w.reshape(Hk, n_tiles, tile_v).transpose(1, 0, 2)        # (n_tiles, Hk, tile_v)

    aw = raw["attn_weight"]
    return {
        "dims": dict(E=E, H=H, V=V, Ep=Ep, Hp=Hp, Hk=Hk, Vp=Vp, tile_v=tile_v,
                     n_v_tiles=n_tiles, n_cores=n_cores,
                     tiles_per_core=n_tiles // n_cores),
        "embedding": jnp.pad(raw["embedding"], ((0, 0), (0, Ep - E))).astype(bf16),
        "attn_w_h": _pad2(aw[:, :H].T, Hp, Hp).astype(bf16),
        "attn_w_e": _pad2(aw[:, H:].T, Hp, Hp).astype(bf16),
        "attn_b": jnp.pad(raw["attn_bias"], (0, Hp - H)).reshape(1, Hp).astype(f32),
        "v_col": _pad2(raw["v_weight"].T, Hp, 1).astype(bf16),
        "w_lstm": w_lstm,
        "b_lstm": b_lstm,
        "fc_w": fc_w,
        "fc_b": jnp.pad(raw["fc_bias"], (0, Vp - V)).reshape(1, Vp).astype(f32),
    }


# ---------------------------------------------------------------------------
# Wrapper
# ---------------------------------------------------------------------------
def decoder_lstm_step(params, input_word, hidden, cell, encoder_outputs):
    """Forward of DecoderLSTM (num_layers=1). Returns (predictions, hidden, cell)."""
    # TODO(synk): the dynamic `hidden.size(0)==1 and encoder_outputs.size(0)!=1`
    # batch-mismatch branch and num_layers>1 stacked LSTMs are not implemented
    # (static matching-batch shapes, single layer; dropout is 0 in that case).
    d = params["dims"]
    E, H, V = d["E"], d["H"], d["V"]
    Ep, Hp, Hk, Vp = d["Ep"], d["Hp"], d["Hk"], d["Vp"]
    tile_v = d["tile_v"]
    n_cores, tiles_per_core = d["n_cores"], d["tiles_per_core"]
    B = input_word.shape[0]
    S = encoder_outputs.shape[1]
    Bp, Sp = _ceil_to(B, 8), _ceil_to(S, 8)

    # glue (plain JAX): embedding gather + padding to (8,128)-aligned shapes
    emb = jnp.take(params["embedding"], input_word, axis=0)               # (B, Ep) bf16
    emb = jnp.pad(emb, ((0, Bp - B), (0, 0)))
    h_last = jnp.pad(hidden[-1].astype(jnp.float32), ((0, Bp - B), (0, Hp - H)))
    c_last = jnp.pad(cell[-1].astype(jnp.float32), ((0, Bp - B), (0, Hp - H)))
    enc = jnp.pad(encoder_outputs.astype(jnp.bfloat16),
                  ((0, Bp - B), (0, Sp - S), (0, Hp - H)))

    vt = lambda i, j: i * tiles_per_core + j     # global vocab-tile index
    # 3-deep buffering on the streamed fc tiles hides the step-0 LSTM bubble; fall
    # back to the default depth when there are too few tiles per core to use it.
    fc_buffers = 3 if tiles_per_core >= 3 else 2

    kernel = functools.partial(decoder_step_kernel, seq_len=S)
    pred, h_new, c_new = pl.pallas_call(
        kernel,
        out_shape=(
            jax.ShapeDtypeStruct((Bp, Vp), jnp.float32),
            jax.ShapeDtypeStruct((n_cores, Bp, Hp), jnp.float32),
            jax.ShapeDtypeStruct((n_cores, Bp, Hp), jnp.float32),
        ),
        grid=(n_cores, tiles_per_core),
        in_specs=[
            pl.BlockSpec((Bp, Ep), lambda i, j: (0, 0)),               # emb (resident)
            pl.BlockSpec((Bp, Hp), lambda i, j: (0, 0)),               # h
            pl.BlockSpec((Bp, Hp), lambda i, j: (0, 0)),               # c
            # TODO(synk): for production shapes (H>=1024, long S on v7x's 64 MiB
            # VMEM) single-buffer these invariants (pl.Buffered(1) or
            # memory_space=pl.ANY + one manual copy) instead of default
            # double-buffering; at these sizes it is irrelevant.
            pl.BlockSpec((Bp, Sp, Hp), lambda i, j: (0, 0, 0)),        # encoder outputs
            pl.BlockSpec((Hp, Hp), lambda i, j: (0, 0)),               # attn_w_h
            pl.BlockSpec((Hp, Hp), lambda i, j: (0, 0)),               # attn_w_e
            pl.BlockSpec((1, Hp), lambda i, j: (0, 0)),                # attn_b
            pl.BlockSpec((Hp, 1), lambda i, j: (0, 0)),                # v
            pl.BlockSpec((Ep + 2 * Hp, 4 * Hp), lambda i, j: (0, 0)),  # fused LSTM weight
            pl.BlockSpec((1, 4 * Hp), lambda i, j: (0, 0)),            # fused LSTM bias
            _spec((1, Hk, tile_v), lambda i, j: (vt(i, j), 0, 0),
                  buffers=fc_buffers),                                 # fc_w tile (streamed)
            _spec((1, tile_v), lambda i, j: (0, vt(i, j)),
                  buffers=fc_buffers),                                 # fc_b tile (streamed)
        ],
        out_specs=(
            pl.BlockSpec((Bp, tile_v), lambda i, j: (0, vt(i, j))),    # logits tile
            pl.BlockSpec((1, Bp, Hp), lambda i, j: (i, 0, 0)),         # new hidden (per core)
            pl.BlockSpec((1, Bp, Hp), lambda i, j: (i, 0, 0)),         # new cell (per core)
        ),
        scratch_shapes=[pltpu.VMEM((Bp, Hk), jnp.bfloat16)],
        compiler_params=pltpu.CompilerParams(
            # Outer axis splits the fc_out stream across TensorCores (v7x); the
            # inner vocab axis carries the scratch / resident LSTM state written
            # at tile 0, so it must stay sequential ("arbitrary").
            dimension_semantics=("parallel", "arbitrary"),
            # within v7x's 64 MiB physical VMEM; can be raised toward ~96 MiB on
            # v5e/v6e (128 MiB) to allow even larger vocab tiles.
            vmem_limit_bytes=48 * 1024 * 1024,
        ),
    )(emb, h_last, c_last, enc,
      params["attn_w_h"], params["attn_w_e"], params["attn_b"], params["v_col"],
      params["w_lstm"], params["b_lstm"], params["fc_w"], params["fc_b"])

    # slice padding back off; both cores write identical states, take copy 0;
    # return PyTorch-style (num_layers=1, B, H) states
    return pred[:B, :V], h_new[0, :B, :H][None], c_new[0, :B, :H][None]


# ---------------------------------------------------------------------------
# Pure-JAX reference (mirrors the PyTorch forward, using the same bf16-rounded
# weights / encoder outputs the kernel streams from HBM, all math in f32)
# ---------------------------------------------------------------------------
def decoder_lstm_reference(raw, input_word, hidden, cell, encoder_outputs):
    f32 = jnp.float32
    r = lambda x: x.astype(jnp.bfloat16).astype(f32)

    emb = jnp.take(r(raw["embedding"]), input_word, axis=0)
    h_prev = hidden[-1]
    c_prev = cell[-1]
    H = h_prev.shape[1]
    enc = r(encoder_outputs)
    aw = r(raw["attn_weight"])

    h_term = h_prev @ aw[:, :H].T
    enc_term = jnp.einsum("bsh,kh->bsk", enc, aw[:, H:])
    energy = jnp.tanh(h_term[:, None, :] + enc_term + raw["attn_bias"])
    scores = jnp.einsum("bsh,h->bs", energy, r(raw["v_weight"])[0])
    attn_w = jax.nn.softmax(scores, axis=1)
    context = jnp.einsum("bs,bsh->bh", attn_w, enc)

    lstm_in = jnp.concatenate([emb, context], axis=1)
    gates = (lstm_in @ r(raw["w_ih"]).T + h_prev @ r(raw["w_hh"]).T
             + raw["b_ih"] + raw["b_hh"])
    i_g = jax.nn.sigmoid(gates[:, 0 * H:1 * H])
    f_g = jax.nn.sigmoid(gates[:, 1 * H:2 * H])
    g_g = jnp.tanh(gates[:, 2 * H:3 * H])
    o_g = jax.nn.sigmoid(gates[:, 3 * H:4 * H])
    c_new = f_g * c_prev + i_g * g_g
    h_new = o_g * jnp.tanh(c_new)
    pred = h_new @ r(raw["fc_weight"]).T + raw["fc_bias"]
    return pred, h_new[None], c_new[None]


if __name__ == "__main__":
    # small shapes consistent with the module's forward
    VOCAB, EMBED, HIDDEN = 500, 16, 32
    BATCH, SEQ, NUM_LAYERS = 2, 6, 1

    key = jax.random.PRNGKey(0)
    k_param, k_word, k_h, k_c, k_enc = jax.random.split(key, 5)
    raw = init_raw_params(k_param, VOCAB, EMBED, HIDDEN)
    # tile_v=256 -> 2 vocab tiles split across the 2-way "parallel" core axis:
    # exercises the streamed fc_out grid path and the dual-core split.
    # (production default is tile_v=8192; never benchmark below ~4096.)
    params = prep_kernel_params(raw, tile_v=256, n_cores=2)

    input_word = jax.random.randint(k_word, (BATCH,), 0, VOCAB, jnp.int32)
    hidden = 0.1 * jax.random.normal(k_h, (NUM_LAYERS, BATCH, HIDDEN), jnp.float32)
    cell = 0.1 * jax.random.normal(k_c, (NUM_LAYERS, BATCH, HIDDEN), jnp.float32)
    encoder_outputs = 0.1 * jax.random.normal(k_enc, (BATCH, SEQ, HIDDEN), jnp.float32)

    pred, h_new, c_new = decoder_lstm_step(params, input_word, hidden, cell, encoder_outputs)
    jax.block_until_ready((pred, h_new, c_new))

    # validate against a pure-JAX mirror of the PyTorch forward
    pred_r, h_r, c_r = decoder_lstm_reference(raw, input_word, hidden, cell, encoder_outputs)
    assert pred.shape == (BATCH, VOCAB)
    assert h_new.shape == (NUM_LAYERS, BATCH, HIDDEN)
    assert c_new.shape == (NUM_LAYERS, BATCH, HIDDEN)
    assert jnp.allclose(pred, pred_r, atol=1e-2, rtol=1e-2), "predictions mismatch"
    assert jnp.allclose(h_new, h_r, atol=5e-3, rtol=1e-2), "hidden mismatch"
    assert jnp.allclose(c_new, c_r, atol=5e-3, rtol=1e-2), "cell mismatch"

    print("KERNEL_OK")
</pallas_src>

<mosaic_0001>
module attributes {stable_mosaic.version = 11 : i64} {
  func.func @decoder_step_kernel(%arg0: i32, %arg1: i32, %arg2: memref<8x128xbf16, #tpu.memory_space<vmem>>, %arg3: memref<8x128xf32, #tpu.memory_space<vmem>>, %arg4: memref<8x128xf32, #tpu.memory_space<vmem>>, %arg5: memref<8x8x128xbf16, #tpu.memory_space<vmem>>, %arg6: memref<128x128xbf16, #tpu.memory_space<vmem>>, %arg7: memref<128x128xbf16, #tpu.memory_space<vmem>>, %arg8: memref<1x128xf32, #tpu.memory_space<vmem>>, %arg9: memref<128x1xbf16, #tpu.memory_space<vmem>>, %arg10: memref<384x512xbf16, #tpu.memory_space<vmem>>, %arg11: memref<1x512xf32, #tpu.memory_space<vmem>>, %arg12: memref<1x32x256xbf16, #tpu.memory_space<vmem>>, %arg13: memref<1x256xf32, #tpu.memory_space<vmem>>, %arg14: memref<8x256xf32, #tpu.memory_space<vmem>>, %arg15: memref<1x8x128xf32, #tpu.memory_space<vmem>>, %arg16: memref<1x8x128xf32, #tpu.memory_space<vmem>>, %arg17: memref<8x32xbf16, #tpu.memory_space<vmem>>) attributes {dimension_semantics = [#tpu.dimension_semantics<parallel>, #tpu.dimension_semantics<arbitrary>], iteration_bounds = array<i64: 2, 1>, scalar_prefetch = 0 : i64, scratch_operands = 1 : i64, tpu.core_type = #tpu.core_type<tc>, window_params = [{pipeline_mode = #tpu.pipeline_mode<synchronous>, transform_indices = @transform_0, window_bounds = array<i64: 8, 128>}, {pipeline_mode = #tpu.pipeline_mode<synchronous>, transform_indices = @transform_1, window_bounds = array<i64: 8, 128>}, {pipeline_mode = #tpu.pipeline_mode<synchronous>, transform_indices = @transform_2, window_bounds = array<i64: 8, 128>}, {pipeline_mode = #tpu.pipeline_mode<synchronous>, transform_indices = @transform_3, window_bounds = array<i64: 8, 8, 128>}, {pipeline_mode = #tpu.pipeline_mode<synchronous>, transform_indices = @transform_4, window_bounds = array<i64: 128, 128>}, {pipeline_mode = #tpu.pipeline_mode<synchronous>, transform_indices = @transform_5, window_bounds = array<i64: 128, 128>}, {pipeline_mode = #tpu.pipeline_mode<synchronous>, transform_indices = @transform_6, window_bounds = array<i64: 1, 128>}, {pipeline_mode = #tpu.pipeline_mode<synchronous>, transform_indices = @transform_7, window_bounds = array<i64: 128, 1>}, {pipeline_mode = #tpu.pipeline_mode<synchronous>, transform_indices = @transform_8, window_bounds = array<i64: 384, 512>}, {pipeline_mode = #tpu.pipeline_mode<synchronous>, transform_indices = @transform_9, window_bounds = array<i64: 1, 512>}, {pipeline_mode = #tpu.pipeline_mode<double_buffered>, transform_indices = @transform_10, window_bounds = array<i64: 1, 32, 256>}, {pipeline_mode = #tpu.pipeline_mode<double_buffered>, transform_indices = @transform_11, window_bounds = array<i64: 1, 256>}, {transform_indices = @transform_12, window_bounds = array<i64: 8, 256>}, {transform_indices = @transform_13, window_bounds = array<i64: 1, 8, 128>}, {transform_indices = @transform_14, window_bounds = array<i64: 1, 8, 128>}]} {
    %c0_i32 = arith.constant 0 : i32
    %0 = arith.cmpi eq, %arg1, %c0_i32 : i32
    %1 = arith.extui %0 : i1 to i32
    %c0_i32_0 = arith.constant 0 : i32
    %2 = arith.cmpi ne, %1, %c0_i32_0 : i32
    scf.if %2 {
      %c0_9 = arith.constant 0 : index
      %c0_10 = arith.constant 0 : index
      %11 = vector.load %arg3[%c0_9, %c0_10] : memref<8x128xf32, #tpu.memory_space<vmem>>, vector<8x128xf32>
      %c0_11 = arith.constant 0 : index
      %c0_12 = arith.constant 0 : index
      %12 = vector.load %arg4[%c0_11, %c0_12] : memref<8x128xf32, #tpu.memory_space<vmem>>, vector<8x128xf32>
      %c0_13 = arith.constant 0 : index
      %c0_14 = arith.constant 0 : index
      %c0_15 = arith.constant 0 : index
      %13 = vector.load %arg5[%c0_13, %c0_14, %c0_15] : memref<8x8x128xbf16, #tpu.memory_space<vmem>>, vector<8x8x128xbf16>
      %14 = arith.truncf %11 : vector<8x128xf32> to vector<8x128xbf16>
      %c0_16 = arith.constant 0 : index
      %c0_17 = arith.constant 0 : index
      %15 = vector.load %arg6[%c0_16, %c0_17] : memref<128x128xbf16, #tpu.memory_space<vmem>>, vector<128x128xbf16>
      %cst_18 = arith.constant dense<0.000000e+00> : vector<8x128xf32>
      %16 = tpu.matmul %14, %15, %cst_18 {dimension_numbers = #tpu.dot_dimension_numbers<[1], [0], [0], [1], [0, 0, 1, 1], [], []>} : vector<8x128xbf16>, vector<128x128xbf16>, vector<8x128xf32> -> vector<8x128xf32>
      %17 = vector.shape_cast %13 : vector<8x8x128xbf16> to vector<64x128xbf16>
      %c0_19 = arith.constant 0 : index
      %c0_20 = arith.constant 0 : index
      %18 = vector.load %arg7[%c0_19, %c0_20] : memref<128x128xbf16, #tpu.memory_space<vmem>>, vector<128x128xbf16>
      %cst_21 = arith.constant dense<0.000000e+00> : vector<64x128xf32>
      %19 = tpu.matmul %17, %18, %cst_21 {dimension_numbers = #tpu.dot_dimension_numbers<[1], [0], [0], [1], [0, 0, 1, 1], [], []>} : vector<64x128xbf16>, vector<128x128xbf16>, vector<64x128xf32> -> vector<64x128xf32>
      %20 = vector.shape_cast %19 : vector<64x128xf32> to vector<8x8x128xf32>
      %21 = vector.shape_cast %16 : vector<8x128xf32> to vector<8x1x128xf32>
      %22 = vector.broadcast %21 : vector<8x1x128xf32> to vector<8x8x128xf32>
      %23 = arith.addf %20, %22 : vector<8x8x128xf32>
      %c0_22 = arith.constant 0 : index
      %c0_23 = arith.constant 0 : index
      %24 = vector.load %arg8[%c0_22, %c0_23] : memref<1x128xf32, #tpu.memory_space<vmem>>, vector<1x128xf32>
      %25 = vector.shape_cast %24 : vector<1x128xf32> to vector<1x1x128xf32>
      %26 = vector.broadcast %25 : vector<1x1x128xf32> to vector<8x8x128xf32>
      %27 = arith.addf %23, %26 : vector<8x8x128xf32>
      %28 = math.tanh %27 : vector<8x8x128xf32>
      %29 = vector.shape_cast %28 : vector<8x8x128xf32> to vector<64x128xf32>
      %30 = arith.truncf %29 : vector<64x128xf32> to vector<64x128xbf16>
      %c0_24 = arith.constant 0 : index
      %c0_25 = arith.constant 0 : index
      %31 = vector.load %arg9[%c0_24, %c0_25] : memref<128x1xbf16, #tpu.memory_space<vmem>>, vector<128x1xbf16>
      %cst_26 = arith.constant dense<0.000000e+00> : vector<64x1xf32>
      %32 = tpu.matmul %30, %31, %cst_26 {dimension_numbers = #tpu.dot_dimension_numbers<[1], [0], [0], [1], [0, 0, 1, 1], [], []>} : vector<64x128xbf16>, vector<128x1xbf16>, vector<64x1xf32> -> vector<64x1xf32>
      %33 = vector.shape_cast %32 : vector<64x1xf32> to vector<8x8x1xf32>
      %34 = tpu.iota {dimensions = array<i32: 1>} : vector<8x8x1xi32>
      %c6_i32 = arith.constant 6 : i32
      %35 = vector.broadcast %c6_i32 : i32 to vector<8x8x1xi32>
      %36 = arith.cmpi slt, %34, %35 : vector<8x8x1xi32>
      %cst_27 = arith.constant 0xFF800000 : f32
      %37 = vector.broadcast %cst_27 : f32 to vector<8x8x1xf32>
      %38 = arith.select %36, %33, %37 : vector<8x8x1xi1>, vector<8x8x1xf32>
      %cst_28 = arith.constant dense<0xFF800000> : vector<8x1xf32>
      %39 = vector.multi_reduction <maximumf>, %38, %cst_28 [1] : vector<8x8x1xf32> to vector<8x1xf32>
      %40 = vector.shape_cast %39 : vector<8x1xf32> to vector<8x1x1xf32>
      %41 = vector.broadcast %40 : vector<8x1x1xf32> to vector<8x8x1xf32>
      %42 = arith.subf %38, %41 : vector<8x8x1xf32>
      %43 = math.exp %42 : vector<8x8x1xf32>
      %cst_29 = arith.constant dense<0.000000e+00> : vector<8x1xf32>
      %44 = vector.multi_reduction <add>, %43, %cst_29 [1] : vector<8x8x1xf32> to vector<8x1xf32>
      %45 = vector.shape_cast %44 : vector<8x1xf32> to vector<8x1x1xf32>
      %46 = tpu.reciprocal %45 {approx = true} : vector<8x1x1xf32> -> vector<8x1x1xf32>
      %47 = vector.broadcast %46 : vector<8x1x1xf32> to vector<8x8x1xf32>
      %48 = arith.mulf %43, %47 : vector<8x8x1xf32>
      %49 = arith.extf %13 : vector<8x8x128xbf16> to vector<8x8x128xf32>
      %50 = vector.broadcast %48 : vector<8x8x1xf32> to vector<8x8x128xf32>
      %51 = arith.mulf %50, %49 : vector<8x8x128xf32>
      %cst_30 = arith.constant dense<0.000000e+00> : vector<8x128xf32>
      %52 = vector.multi_reduction <add>, %51, %cst_30 [1] : vector<8x8x128xf32> to vector<8x128xf32>
      %c0_31 = arith.constant 0 : index
      %c0_32 = arith.constant 0 : index
      %53 = vector.load %arg2[%c0_31, %c0_32] : memref<8x128xbf16, #tpu.memory_space<vmem>>, vector<8x128xbf16>
      %54 = arith.truncf %52 : vector<8x128xf32> to vector<8x128xbf16>
      %55 = arith.truncf %11 : vector<8x128xf32> to vector<8x128xbf16>
      %56 = tpu.concatenate %53, %54, %55 in 1 : vector<8x128xbf16>, vector<8x128xbf16>, vector<8x128xbf16> -> vector<8x384xbf16>
      %c0_33 = arith.constant 0 : index
      %c0_34 = arith.constant 0 : index
      %57 = vector.load %arg10[%c0_33, %c0_34] : memref<384x512xbf16, #tpu.memory_space<vmem>>, vector<384x512xbf16>
      %cst_35 = arith.constant dense<0.000000e+00> : vector<8x512xf32>
      %58 = tpu.matmul %56, %57, %cst_35 {dimension_numbers = #tpu.dot_dimension_numbers<[1], [0], [0], [1], [0, 0, 1, 1], [], []>} : vector<8x384xbf16>, vector<384x512xbf16>, vector<8x512xf32> -> vector<8x512xf32>
      %c0_36 = arith.constant 0 : index
      %c0_37 = arith.constant 0 : index
      %59 = vector.load %arg11[%c0_36, %c0_37] : memref<1x512xf32, #tpu.memory_space<vmem>>, vector<1x512xf32>
      %60 = vector.broadcast %59 : vector<1x512xf32> to vector<8x512xf32>
      %61 = arith.addf %58, %60 : vector<8x512xf32>
      %62 = vector.extract_strided_slice %61 {offsets = [0, 0], sizes = [8, 128], strides = [1, 1]} : vector<8x512xf32> to vector<8x128xf32>
      %63 = arith.negf %62 : vector<8x128xf32>
      %64 = math.exp %63 : vector<8x128xf32>
      %cst_38 = arith.constant 1.000000e+00 : f32
      %65 = vector.broadcast %cst_38 : f32 to vector<8x128xf32>
      %66 = arith.addf %65, %64 : vector<8x128xf32>
      %67 = arith.divf %65, %66 : vector<8x128xf32>
      %68 = vector.extract_strided_slice %61 {offsets = [0, 128], sizes = [8, 128], strides = [1, 1]} : vector<8x512xf32> to vector<8x128xf32>
      %69 = arith.negf %68 : vector<8x128xf32>
      %70 = math.exp %69 : vector<8x128xf32>
      %cst_39 = arith.constant 1.000000e+00 : f32
      %71 = vector.broadcast %cst_39 : f32 to vector<8x128xf32>
      %72 = arith.addf %71, %70 : vector<8x128xf32>
      %73 = arith.divf %71, %72 : vector<8x128xf32>
      %74 = vector.extract_strided_slice %61 {offsets = [0, 256], sizes = [8, 128], strides = [1, 1]} : vector<8x512xf32> to vector<8x128xf32>
      %75 = math.tanh %74 : vector<8x128xf32>
      %76 = vector.extract_strided_slice %61 {offsets = [0, 384], sizes = [8, 128], strides = [1, 1]} : vector<8x512xf32> to vector<8x128xf32>
      %77 = arith.negf %76 : vector<8x128xf32>
      %78 = math.exp %77 : vector<8x128xf32>
      %cst_40 = arith.constant 1.000000e+00 : f32
      %79 = vector.broadcast %cst_40 : f32 to vector<8x128xf32>
      %80 = arith.addf %79, %78 : vector<8x128xf32>
      %81 = arith.divf %79, %80 : vector<8x128xf32>
      %82 = arith.mulf %73, %12 : vector<8x128xf32>
      %83 = arith.mulf %67, %75 : vector<8x128xf32>
      %84 = arith.addf %82, %83 : vector<8x128xf32>
      %85 = math.tanh %84 : vector<8x128xf32>
      %86 = arith.mulf %81, %85 : vector<8x128xf32>
      %87 = vector.shape_cast %86 : vector<8x128xf32> to vector<1x8x128xf32>
      %c0_41 = arith.constant 0 : index
      %c0_42 = arith.constant 0 : index
      %c0_43 = arith.constant 0 : index
      %88 = vector.load %arg15[%c0_41, %c0_42, %c0_43] : memref<1x8x128xf32, #tpu.memory_space<vmem>>, vector<1x8x128xf32>
      tpu.vector_store %arg15[%c0_41, %c0_42, %c0_43], %87 {strides = array<i32>} : memref<1x8x128xf32, #tpu.memory_space<vmem>>, vector<1x8x128xf32>,
      %89 = vector.shape_cast %84 : vector<8x128xf32> to vector<1x8x128xf32>
      %c0_44 = arith.constant 0 : index
      %c0_45 = arith.constant 0 : index
      %c0_46 = arith.constant 0 : index
      %90 = vector.load %arg16[%c0_44, %c0_45, %c0_46] : memref<1x8x128xf32, #tpu.memory_space<vmem>>, vector<1x8x128xf32>
      tpu.vector_store %arg16[%c0_44, %c0_45, %c0_46], %89 {strides = array<i32>} : memref<1x8x128xf32, #tpu.memory_space<vmem>>, vector<1x8x128xf32>,
      %91 = vector.extract_strided_slice %86 {offsets = [0, 0], sizes = [8, 32], strides = [1, 1]} : vector<8x128xf32> to vector<8x32xf32>
      %92 = arith.truncf %91 : vector<8x32xf32> to vector<8x32xbf16>
      %c0_47 = arith.constant 0 : index
      %c0_48 = arith.constant 0 : index
      %93 = vector.load %arg17[%c0_47, %c0_48] : memref<8x32xbf16, #tpu.memory_space<vmem>>, vector<8x32xbf16>
      tpu.vector_store %arg17[%c0_47, %c0_48], %92 {strides = array<i32>} : memref<8x32xbf16, #tpu.memory_space<vmem>>, vector<8x32xbf16>,
    } else {
    }
    %c0 = arith.constant 0 : index
    %c0_1 = arith.constant 0 : index
    %3 = vector.load %arg17[%c0, %c0_1] : memref<8x32xbf16, #tpu.memory_space<vmem>>, vector<8x32xbf16>
    %c0_2 = arith.constant 0 : index
    %c0_3 = arith.constant 0 : index
    %c0_4 = arith.constant 0 : index
    %4 = vector.load %arg12[%c0_2, %c0_3, %c0_4] : memref<1x32x256xbf16, #tpu.memory_space<vmem>>, vector<1x32x256xbf16>
    %5 = vector.shape_cast %4 : vector<1x32x256xbf16> to vector<32x256xbf16>
    %cst = arith.constant dense<0.000000e+00> : vector<8x256xf32>
    %6 = tpu.matmul %3, %5, %cst {dimension_numbers = #tpu.dot_dimension_numbers<[1], [0], [0], [1], [0, 0, 1, 1], [], []>} : vector<8x32xbf16>, vector<32x256xbf16>, vector<8x256xf32> -> vector<8x256xf32>
    %c0_5 = arith.constant 0 : index
    %c0_6 = arith.constant 0 : index
    %7 = vector.load %arg13[%c0_5, %c0_6] : memref<1x256xf32, #tpu.memory_space<vmem>>, vector<1x256xf32>
    %8 = vector.broadcast %7 : vector<1x256xf32> to vector<8x256xf32>
    %9 = arith.addf %6, %8 : vector<8x256xf32>
    %c0_7 = arith.constant 0 : index
    %c0_8 = arith.constant 0 : index
    %10 = vector.load %arg14[%c0_7, %c0_8] : memref<8x256xf32, #tpu.memory_space<vmem>>, vector<8x256xf32>
    tpu.vector_store %arg14[%c0_7, %c0_8], %9 {strides = array<i32>} : memref<8x256xf32, #tpu.memory_space<vmem>>, vector<8x256xf32>,
    return
  }
  func.func @transform_0(%arg0: i32, %arg1: i32) -> (i32, i32) {
    %c0_i32 = arith.constant 0 : i32
    %c0_i32_0 = arith.constant 0 : i32
    %c0_i32_1 = arith.constant 0 : i32
    return %c0_i32, %c0_i32_0 : i32, i32
  }
  func.func @transform_1(%arg0: i32, %arg1: i32) -> (i32, i32) {
    %c0_i32 = arith.constant 0 : i32
    %c0_i32_0 = arith.constant 0 : i32
    %c0_i32_1 = arith.constant 0 : i32
    return %c0_i32, %c0_i32_0 : i32, i32
  }
  func.func @transform_2(%arg0: i32, %arg1: i32) -> (i32, i32) {
    %c0_i32 = arith.constant 0 : i32
    %c0_i32_0 = arith.constant 0 : i32
    %c0_i32_1 = arith.constant 0 : i32
    return %c0_i32, %c0_i32_0 : i32, i32
  }
  func.func @transform_3(%arg0: i32, %arg1: i32) -> (i32, i32, i32) {
    %c0_i32 = arith.constant 0 : i32
    %c0_i32_0 = arith.constant 0 : i32
    %c0_i32_1 = arith.constant 0 : i32
    %c0_i32_2 = arith.constant 0 : i32
    return %c0_i32, %c0_i32_0, %c0_i32_1 : i32, i32, i32
  }
  func.func @transform_4(%arg0: i32, %arg1: i32) -> (i32, i32) {
    %c0_i32 = arith.constant 0 : i32
    %c0_i32_0 = arith.constant 0 : i32
    %c0_i32_1 = arith.constant 0 : i32
    return %c0_i32, %c0_i32_0 : i32, i32
  }
  func.func @transform_5(%arg0: i32, %arg1: i32) -> (i32, i32) {
    %c0_i32 = arith.constant 0 : i32
    %c0_i32_0 = arith.constant 0 : i32
    %c0_i32_1 = arith.constant 0 : i32
    return %c0_i32, %c0_i32_0 : i32, i32
  }
  func.func @transform_6(%arg0: i32, %arg1: i32) -> (i32, i32) {
    %c0_i32 = arith.constant 0 : i32
    %c0_i32_0 = arith.constant 0 : i32
    %c0_i32_1 = arith.constant 0 : i32
    return %c0_i32, %c0_i32_0 : i32, i32
  }
  func.func @transform_7(%arg0: i32, %arg1: i32) -> (i32, i32) {
    %c0_i32 = arith.constant 0 : i32
    %c0_i32_0 = arith.constant 0 : i32
    %c0_i32_1 = arith.constant 0 : i32
    return %c0_i32, %c0_i32_0 : i32, i32
  }
  func.func @transform_8(%arg0: i32, %arg1: i32) -> (i32, i32) {
    %c0_i32 = arith.constant 0 : i32
    %c0_i32_0 = arith.constant 0 : i32
    %c0_i32_1 = arith.constant 0 : i32
    return %c0_i32, %c0_i32_0 : i32, i32
  }
  func.func @transform_9(%arg0: i32, %arg1: i32) -> (i32, i32) {
    %c0_i32 = arith.constant 0 : i32
    %c0_i32_0 = arith.constant 0 : i32
    %c0_i32_1 = arith.constant 0 : i32
    return %c0_i32, %c0_i32_0 : i32, i32
  }
  func.func @transform_10(%arg0: i32, %arg1: i32) -> (i32, i32, i32) {
    %c1_i32 = arith.constant 1 : i32
    %0 = arith.muli %arg0, %c1_i32 : i32
    %1 = arith.addi %0, %arg1 : i32
    %c0_i32 = arith.constant 0 : i32
    %c0_i32_0 = arith.constant 0 : i32
    %c0_i32_1 = arith.constant 0 : i32
    return %1, %c0_i32, %c0_i32_0 : i32, i32, i32
  }
  func.func @transform_11(%arg0: i32, %arg1: i32) -> (i32, i32) {
    %c1_i32 = arith.constant 1 : i32
    %0 = arith.muli %arg0, %c1_i32 : i32
    %1 = arith.addi %0, %arg1 : i32
    %c0_i32 = arith.constant 0 : i32
    %c0_i32_0 = arith.constant 0 : i32
    return %c0_i32, %1 : i32, i32
  }
  func.func @transform_12(%arg0: i32, %arg1: i32) -> (i32, i32) {
    %c1_i32 = arith.constant 1 : i32
    %0 = arith.muli %arg0, %c1_i32 : i32
    %1 = arith.addi %0, %arg1 : i32
    %c0_i32 = arith.constant 0 : i32
    %c0_i32_0 = arith.constant 0 : i32
    return %c0_i32, %1 : i32, i32
  }
  func.func @transform_13(%arg0: i32, %arg1: i32) -> (i32, i32, i32) {
    %c0_i32 = arith.constant 0 : i32
    %c0_i32_0 = arith.constant 0 : i32
    %c0_i32_1 = arith.constant 0 : i32
    return %arg0, %c0_i32, %c0_i32_0 : i32, i32, i32
  }
  func.func @transform_14(%arg0: i32, %arg1: i32) -> (i32, i32, i32) {
    %c0_i32 = arith.constant 0 : i32
    %c0_i32_0 = arith.constant 0 : i32
    %c0_i32_1 = arith.constant 0 : i32
    return %arg0, %c0_i32, %c0_i32_0 : i32, i32, i32
  }
}

</mosaic_0001>

<llo_original>
// kernel: tpu_custom_call.1
$region0: #{tpu_custom_call.1}
  #allocation0 [shape = 'u32[]', space=smem, size = 0x4, offset = 0x4, fixed_abs, tag = 'smem constant byte address 0x4 - core index']
  #allocation1 [shape = 'u32[144,128]{1,0:T(1,128)}', space=vmem, size = 0x12000, scoped, tag = 'internal scratch']
  #allocation2 [shape = 'bf16[8,32]{1,0:T(8,128)(2,1)}', space=vmem, size = 0x800, scoped, tag = 'scratch operand']
  %s0 = inlined_call_operand.hbm [shape: bf16[8,128], index: 0, kind: input, shape index: {}]
  %s1 = inlined_call_operand.vmem [shape: f32[8,128], index: 1, kind: input, shape index: {}]
  %s2 = inlined_call_operand.hbm [shape: f32[8,128], index: 2, kind: input, shape index: {}]
  %s3 = inlined_call_operand.hbm [shape: bf16[8,8,128], index: 3, kind: input, shape index: {}]
  %s4 = inlined_call_operand.vmem [shape: bf16[128,128], index: 4, kind: input, shape index: {}]
  %s5 = inlined_call_operand.hbm [shape: bf16[128,128], index: 5, kind: input, shape index: {}]
  %s6 = inlined_call_operand.hbm [shape: f32[1,128], index: 6, kind: input, shape index: {}]
  %s7 = inlined_call_operand.vmem [shape: bf16[128,1], index: 7, kind: input, shape index: {}]
  %s8 = inlined_call_operand.hbm [shape: bf16[384,512], index: 8, kind: input, shape index: {}]
  %s9 = inlined_call_operand.vmem [shape: f32[1,512], index: 9, kind: input, shape index: {}]
  %s10 = inlined_call_operand.hbm [shape: bf16[2,32,256], index: 10, kind: input, shape index: {}]
  %s11 = inlined_call_operand.vmem [shape: f32[1,512], index: 11, kind: input, shape index: {}]
  %s12 = inlined_call_operand.hbm [shape: f32[8,512], index: 12, kind: output, shape index: {0}]
  %s13 = inlined_call_operand.hbm [shape: f32[2,8,128], index: 13, kind: output, shape index: {1}]
  %s14 = inlined_call_operand.hbm [shape: f32[2,8,128], index: 14, kind: output, shape index: {2}]
  %15 = xla_tuple %s12, %s13, %s14
  %s16 = sld [smem:[#allocation0]]
  $region129: #{tpu_custom_call.1} parent=0
    _
  %s18 = ssub.s32 1, %s16
  %s19 = scalar_select 0, %s18, %s16
  $region1: #{tpu_custom_call.1} parent=0
    #allocation3 [shape = 'u8[2048]{0}', space=vmem, size = 0x800, scoped, tag = 'input window, operand 0, single buffered']
    #allocation4 [shape = 's32[2]{0}', space=sflag, size = 0x8, scoped, tag = 'scoped memory for tpu_custom_call.1']
    #allocation5 [shape = 's32[2]{0}', space=sflag, size = 0x8, scoped, tag = 'scoped memory for tpu_custom_call.1']
    #allocation6 [shape = 'u8[4096]{0}', space=vmem, size = 0x1000, scoped, tag = 'input window, operand 2, single buffered']
    #allocation7 [shape = 's32[1]{0}', space=sflag, size = 0x4, scoped, tag = 'scoped memory for tpu_custom_call.1']
    #allocation8 [shape = 'u8[16384]{0}', space=vmem, size = 0x4000, scoped, tag = 'input window, operand 3, single buffered']
    #allocation9 [shape = 'u8[32768]{0}', space=vmem, size = 0x8000, scoped, tag = 'input window, operand 5, single buffered']
    #allocation10 [shape = 's32[1]{0}', space=sflag, size = 0x4, scoped, tag = 'scoped memory for tpu_custom_call.1']
    #allocation11 [shape = 'u8[512]{0}', space=vmem, size = 0x400, scoped, tag = 'input window, operand 6, single buffered']
    #allocation12 [shape = 'u8[393216]{0}', space=vmem, size = 0x60000, scoped, tag = 'input window, operand 8, single buffered']
    #allocation13 [shape = 's32[1]{0}', space=sflag, size = 0x4, scoped, tag = 'scoped memory for tpu_custom_call.1']
    #allocation14 [shape = 'u8[32768]{0}', space=vmem, size = 0x8000, scoped, tag = 'input window, operand 10']
    #allocation15 [shape = 'u8[16384]{0}', space=vmem, size = 0x4000, scoped, tag = 'output window, operand 0']
    #allocation16 [shape = 'u8[8192]{0}', space=vmem, size = 0x2000, scoped, tag = 'output window, operand 1']
    #allocation17 [shape = 's32[2]{0}', space=sflag, size = 0x8, scoped, tag = 'scoped memory for tpu_custom_call.1']
    #allocation18 [shape = 'u8[8192]{0}', space=vmem, size = 0x2000, scoped, tag = 'output window, operand 2']
    %20 = vsyncpa [#allocation4], 0
    %21 = vsyncpa [#allocation7], 0
    %22 = vsyncpa [#allocation10], 0
    %23 = vsyncpa [#allocation13], 0
    %24 = vsyncpa [#allocation5], 0
    %s25 = scalar_lea.sflag [#allocation5], 1
    %26 = vsyncpa %s25, 0
    %27 = vsyncpa [#allocation17], 0
    %s28 = scalar_lea.sflag [#allocation17], 1
    %29 = vsyncpa %s28, 0
    loop: start=0, step=1, limit=4
    $region2: #{tpu_custom_call.1} parent=1 // loop_pre_header
      _
    $region3: #{tpu_custom_call.1} parent=1 // loop_header
      %s31 = sphi 0, %s35
      %p32 = scmp.ge.s32.totalorder %s31, 4
      %s38 = sphi 0, %s50
      %s39 = sphi 0, %s46
      %s40 = sphi 0, %s38
      %s41 = sphi 0, %s39
      %s42 = sphi 0, %s40
      %s43 = sphi 0, %s41
      %s51 = sphi 0, %s51
      %s53 = sphi 0, %s51
      %s54 = sphi 0, %s53
      %s68 = sphi 0, %s54
      %s72 = sphi 0, %s72
      %s74 = sphi 0, %s72
      %s75 = sphi 0, %s74
      %s89 = sphi 0, %s75
      %s93 = sphi 0, %s93
      %s95 = sphi 0, %s93
      %s96 = sphi 0, %s95
      %s110 = sphi 0, %s96
      %s114 = sphi 0, %s114
      %s116 = sphi 0, %s114
      %s117 = sphi 0, %s116
      %s131 = sphi 0, %s117
      %s135 = sphi 0, %s135
      %s137 = sphi 0, %s135
      %s138 = sphi 0, %s137
      %s152 = sphi 0, %s138
      %s156 = sphi 0, %s156
      %s158 = sphi 0, %s156
      %s159 = sphi 0, %s158
      %s173 = sphi 0, %s159
      %s177 = sphi 0, %s177
      %s179 = sphi 0, %s177
      %s180 = sphi 0, %s179
      %s194 = sphi 0, %s180
      %s198 = sphi 0, %s198
      %s200 = sphi 0, %s198
      %s201 = sphi 0, %s200
      %s215 = sphi 0, %s201
      %s219 = sphi 0, %s219
      %s221 = sphi 0, %s219
      %s222 = sphi 0, %s221
      %s236 = sphi 0, %s222
      %s240 = sphi 0, %s240
      %s242 = sphi 0, %s240
      %s243 = sphi 0, %s242
      %s257 = sphi 0, %s243
      %s265 = sphi 0, %s267
      %s268 = sphi 0, %s265
      %s269 = sphi 0, %s268
      %s285 = sphi 0, %s269
      %s293 = sphi 0, %s295
      %s296 = sphi 0, %s293
      %s297 = sphi 0, %s296
      %s313 = sphi 0, %s297
      %s321 = sphi 0, %s323
      %s324 = sphi 0, %s321
      %s325 = sphi 0, %s324
      %s341 = sphi 0, %s325
      %s347 = sphi 0, %s349
      %s350 = sphi 0, %s347
      %s351 = sphi 0, %s350
      %s367 = sphi 0, %s351
      %s373 = sphi 0, %s375
      %s376 = sphi 0, %s373
      %s377 = sphi 0, %s376
      %s393 = sphi 0, %s377
    $region4: #{tpu_custom_call.1} parent=1 // loop_header_branch
      %34 = sbr.rel (%p32) target = $region8
    $region5: #{tpu_custom_call.1} parent=1 // loop_body
      %s36 = ssub.s32 %s31, 1
      %s37 = ssub.s32 %s31, 2
      %s44 = sadd.s32 1, %s39
      %p45 = scmp.ge.s32.totalorder %s44, 1
      %s46 = scalar_select %p45, 0, %s44
      %s47 = sadd.s32 1, %s38
      %s48 = scalar_select %p45, %s47, %s38
      %p49 = scmp.ge.s32.totalorder %s48, 2
      %s50 = scalar_select %p49, 0, %s48
      %s52 = sadd.s32 %s51, 1
      %p55 = scmp.eq.s32.totalorder %s31, 1
      %p56 = scmp.ne.s32.totalorder %s51, %s53
      %p57 = scmp.eq.s32.totalorder %s31, 0
      %p58 = por %p56, %p57
      %p59 = scmp.ne.s32.totalorder %s51, %s53
      %p60 = scmp.eq.s32.totalorder %s36, 1
      %p61 = por %p59, %p60
      %p62 = scmp.ne.s32.totalorder %s53, %s54
      %p63 = scmp.eq.s32.totalorder %s36, 0
      %p64 = por %p62, %p63
      %p65 = scmp.ne.s32.totalorder %s53, %s54
      %p66 = scmp.eq.s32.totalorder %s37, 1
      %p67 = por %p65, %p66
      %p69 = scmp.ne.s32.totalorder %s54, %s68
      %p70 = scmp.eq.s32.totalorder %s37, 0
      %p71 = por %p69, %p70
      %s73 = sadd.s32 %s72, 1
      %p76 = scmp.eq.s32.totalorder %s31, 1
      %p77 = scmp.ne.s32.totalorder %s72, %s74
      %p78 = scmp.eq.s32.totalorder %s31, 0
      %p79 = por %p77, %p78
      %p80 = scmp.ne.s32.totalorder %s72, %s74
      %p81 = scmp.eq.s32.totalorder %s36, 1
      %p82 = por %p80, %p81
      %p83 = scmp.ne.s32.totalorder %s74, %s75
      %p84 = scmp.eq.s32.totalorder %s36, 0
      %p85 = por %p83, %p84
      %p86 = scmp.ne.s32.totalorder %s74, %s75
      %p87 = scmp.eq.s32.totalorder %s37, 1
      %p88 = por %p86, %p87
      %p90 = scmp.ne.s32.totalorder %s75, %s89
      %p91 = scmp.eq.s32.totalorder %s37, 0
      %p92 = por %p90, %p91
      %s94 = sadd.s32 %s93, 1
      %p97 = scmp.eq.s32.totalorder %s31, 1
      %p98 = scmp.ne.s32.totalorder %s93, %s95
      %p99 = scmp.eq.s32.totalorder %s31, 0
      %p100 = por %p98, %p99
      %p101 = scmp.ne.s32.totalorder %s93, %s95
      %p102 = scmp.eq.s32.totalorder %s36, 1
      %p103 = por %p101, %p102
      %p104 = scmp.ne.s32.totalorder %s95, %s96
      %p105 = scmp.eq.s32.totalorder %s36, 0
      %p106 = por %p104, %p105
      %p107 = scmp.ne.s32.totalorder %s95, %s96
      %p108 = scmp.eq.s32.totalorder %s37, 1
      %p109 = por %p107, %p108
      %p111 = scmp.ne.s32.totalorder %s96, %s110
      %p112 = scmp.eq.s32.totalorder %s37, 0
      %p113 = por %p111, %p112
      %s115 = sadd.s32 %s114, 1
      %p118 = scmp.eq.s32.totalorder %s31, 1
      %p119 = scmp.ne.s32.totalorder %s114, %s116
      %p120 = scmp.eq.s32.totalorder %s31, 0
      %p121 = por %p119, %p120
      %p122 = scmp.ne.s32.totalorder %s114, %s116
      %p123 = scmp.eq.s32.totalorder %s36, 1
      %p124 = por %p122, %p123
      %p125 = scmp.ne.s32.totalorder %s116, %s117
      %p126 = scmp.eq.s32.totalorder %s36, 0
      %p127 = por %p125, %p126
      %p128 = scmp.ne.s32.totalorder %s116, %s117
      %p129 = scmp.eq.s32.totalorder %s37, 1
      %p130 = por %p128, %p129
      %p132 = scmp.ne.s32.totalorder %s117, %s131
      %p133 = scmp.eq.s32.totalorder %s37, 0
      %p134 = por %p132, %p133
      %s136 = sadd.s32 %s135, 1
      %p139 = scmp.eq.s32.totalorder %s31, 1
      %p140 = scmp.ne.s32.totalorder %s135, %s137
      %p141 = scmp.eq.s32.totalorder %s31, 0
      %p142 = por %p140, %p141
      %p143 = scmp.ne.s32.totalorder %s135, %s137
      %p144 = scmp.eq.s32.totalorder %s36, 1
      %p145 = por %p143, %p144
      %p146 = scmp.ne.s32.totalorder %s137, %s138
      %p147 = scmp.eq.s32.totalorder %s36, 0
      %p148 = por %p146, %p147
      %p149 = scmp.ne.s32.totalorder %s137, %s138
      %p150 = scmp.eq.s32.totalorder %s37, 1
      %p151 = por %p149, %p150
      %p153 = scmp.ne.s32.totalorder %s138, %s152
      %p154 = scmp.eq.s32.totalorder %s37, 0
      %p155 = por %p153, %p154
      %s157 = sadd.s32 %s156, 1
      %p160 = scmp.eq.s32.totalorder %s31, 1
      %p161 = scmp.ne.s32.totalorder %s156, %s158
      %p162 = scmp.eq.s32.totalorder %s31, 0
      %p163 = por %p161, %p162
      %p164 = scmp.ne.s32.totalorder %s156, %s158
      %p165 = scmp.eq.s32.totalorder %s36, 1
      %p166 = por %p164, %p165
      %p167 = scmp.ne.s32.totalorder %s158, %s159
      %p168 = scmp.eq.s32.totalorder %s36, 0
      %p169 = por %p167, %p168
      %p170 = scmp.ne.s32.totalorder %s158, %s159
      %p171 = scmp.eq.s32.totalorder %s37, 1
      %p172 = por %p170, %p171
      %p174 = scmp.ne.s32.totalorder %s159, %s173
      %p175 = scmp.eq.s32.totalorder %s37, 0
      %p176 = por %p174, %p175
      %s178 = sadd.s32 %s177, 1
      %p181 = scmp.eq.s32.totalorder %s31, 1
      %p182 = scmp.ne.s32.totalorder %s177, %s179
      %p183 = scmp.eq.s32.totalorder %s31, 0
      %p184 = por %p182, %p183
      %p185 = scmp.ne.s32.totalorder %s177, %s179
      %p186 = scmp.eq.s32.totalorder %s36, 1
      %p187 = por %p185, %p186
      %p188 = scmp.ne.s32.totalorder %s179, %s180
      %p189 = scmp.eq.s32.totalorder %s36, 0
      %p190 = por %p188, %p189
      %p191 = scmp.ne.s32.totalorder %s179, %s180
      %p192 = scmp.eq.s32.totalorder %s37, 1
      %p193 = por %p191, %p192
      %p195 = scmp.ne.s32.totalorder %s180, %s194
      %p196 = scmp.eq.s32.totalorder %s37, 0
      %p197 = por %p195, %p196
      %s199 = sadd.s32 %s198, 1
      %p202 = scmp.eq.s32.totalorder %s31, 1
      %p203 = scmp.ne.s32.totalorder %s198, %s200
      %p204 = scmp.eq.s32.totalorder %s31, 0
      %p205 = por %p203, %p204
      %p206 = scmp.ne.s32.totalorder %s198, %s200
      %p207 = scmp.eq.s32.totalorder %s36, 1
      %p208 = por %p206, %p207
      %p209 = scmp.ne.s32.totalorder %s200, %s201
      %p210 = scmp.eq.s32.totalorder %s36, 0
      %p211 = por %p209, %p210
      %p212 = scmp.ne.s32.totalorder %s200, %s201
      %p213 = scmp.eq.s32.totalorder %s37, 1
      %p214 = por %p212, %p213
      %p216 = scmp.ne.s32.totalorder %s201, %s215
      %p217 = scmp.eq.s32.totalorder %s37, 0
      %p218 = por %p216, %p217
      %s220 = sadd.s32 %s219, 1
      %p223 = scmp.eq.s32.totalorder %s31, 1
      %p224 = scmp.ne.s32.totalorder %s219, %s221
      %p225 = scmp.eq.s32.totalorder %s31, 0
      %p226 = por %p224, %p225
      %p227 = scmp.ne.s32.totalorder %s219, %s221
      %p228 = scmp.eq.s32.totalorder %s36, 1
      %p229 = por %p227, %p228
      %p230 = scmp.ne.s32.totalorder %s221, %s222
      %p231 = scmp.eq.s32.totalorder %s36, 0
      %p232 = por %p230, %p231
      %p233 = scmp.ne.s32.totalorder %s221, %s222
      %p234 = scmp.eq.s32.totalorder %s37, 1
      %p235 = por %p233, %p234
      %p237 = scmp.ne.s32.totalorder %s222, %s236
      %p238 = scmp.eq.s32.totalorder %s37, 0
      %p239 = por %p237, %p238
      %s241 = sadd.s32 %s240, 1
      %p244 = scmp.eq.s32.totalorder %s31, 1
      %p245 = scmp.ne.s32.totalorder %s240, %s242
      %p246 = scmp.eq.s32.totalorder %s31, 0
      %p247 = por %p245, %p246
      %p248 = scmp.ne.s32.totalorder %s240, %s242
      %p249 = scmp.eq.s32.totalorder %s36, 1
      %p250 = por %p248, %p249
      %p251 = scmp.ne.s32.totalorder %s242, %s243
      %p252 = scmp.eq.s32.totalorder %s36, 0
      %p253 = por %p251, %p252
      %p254 = scmp.ne.s32.totalorder %s242, %s243
      %p255 = scmp.eq.s32.totalorder %s37, 1
      %p256 = por %p254, %p255
      %p258 = scmp.ne.s32.totalorder %s243, %s257
      %p259 = scmp.eq.s32.totalorder %s37, 0
      %p260 = por %p258, %p259
      %s261 = sadd.s32 %s38, %s39
      %s262 = sadd.s32 %s50, %s46
      %s263 = ssub.s32 %s261, %s262
      %p264 = scmp.eq.s32.totalorder %s263, 0
      %s266 = sadd.s32 %s265, 1
      %s267 = scalar_select %p264, %s265, %s266
      %p270 = pneg %p264
      %p271 = scmp.eq.s32.totalorder %s31, 1
      %p272 = por %p270, %p271
      %p273 = scmp.ne.s32.totalorder %s265, %s268
      %p274 = scmp.eq.s32.totalorder %s31, 0
      %p275 = por %p273, %p274
      %p276 = scmp.ne.s32.totalorder %s265, %s268
      %p277 = scmp.eq.s32.totalorder %s36, 1
      %p278 = por %p276, %p277
      %p279 = scmp.ne.s32.totalorder %s268, %s269
      %p280 = scmp.eq.s32.totalorder %s36, 0
      %p281 = por %p279, %p280
      %p282 = scmp.ne.s32.totalorder %s268, %s269
      %p283 = scmp.eq.s32.totalorder %s37, 1
      %p284 = por %p282, %p283
      %p286 = scmp.ne.s32.totalorder %s269, %s285
      %p287 = scmp.eq.s32.totalorder %s37, 0
      %p288 = por %p286, %p287
      %s289 = sadd.s32 %s38, %s39
      %s290 = sadd.s32 %s50, %s46
      %s291 = ssub.s32 %s289, %s290
      %p292 = scmp.eq.s32.totalorder %s291, 0
      %s294 = sadd.s32 %s293, 1
      %s295 = scalar_select %p292, %s293, %s294
      %p298 = pneg %p292
      %p299 = scmp.eq.s32.totalorder %s31, 1
      %p300 = por %p298, %p299
      %p301 = scmp.ne.s32.totalorder %s293, %s296
      %p302 = scmp.eq.s32.totalorder %s31, 0
      %p303 = por %p301, %p302
      %p304 = scmp.ne.s32.totalorder %s293, %s296
      %p305 = scmp.eq.s32.totalorder %s36, 1
      %p306 = por %p304, %p305
      %p307 = scmp.ne.s32.totalorder %s296, %s297
      %p308 = scmp.eq.s32.totalorder %s36, 0
      %p309 = por %p307, %p308
      %p310 = scmp.ne.s32.totalorder %s296, %s297
      %p311 = scmp.eq.s32.totalorder %s37, 1
      %p312 = por %p310, %p311
      %p314 = scmp.ne.s32.totalorder %s297, %s313
      %p315 = scmp.eq.s32.totalorder %s37, 0
      %p316 = por %p314, %p315
      %s317 = sadd.s32 %s38, %s39
      %s318 = sadd.s32 %s50, %s46
      %s319 = ssub.s32 %s317, %s318
      %p320 = scmp.eq.s32.totalorder %s319, 0
      %s322 = sadd.s32 %s321, 1
      %s323 = scalar_select %p320, %s321, %s322
      %p326 = pneg %p320
      %p327 = scmp.eq.s32.totalorder %s31, 1
      %p328 = por %p326, %p327
      %p329 = scmp.ne.s32.totalorder %s321, %s324
      %p330 = scmp.eq.s32.totalorder %s31, 0
      %p331 = por %p329, %p330
      %p332 = scmp.ne.s32.totalorder %s321, %s324
      %p333 = scmp.eq.s32.totalorder %s36, 1
      %p334 = por %p332, %p333
      %p335 = scmp.ne.s32.totalorder %s324, %s325
      %p336 = scmp.eq.s32.totalorder %s36, 0
      %p337 = por %p335, %p336
      %p338 = scmp.ne.s32.totalorder %s324, %s325
      %p339 = scmp.eq.s32.totalorder %s37, 1
      %p340 = por %p338, %p339
      %p342 = scmp.ne.s32.totalorder %s325, %s341
      %p343 = scmp.eq.s32.totalorder %s37, 0
      %p344 = por %p342, %p343
      %s345 = ssub.s32 %s38, %s50
      %p346 = scmp.eq.s32.totalorder %s345, 0
      %s348 = sadd.s32 %s347, 1
      %s349 = scalar_select %p346, %s347, %s348
      %p352 = pneg %p346
      %p353 = scmp.eq.s32.totalorder %s31, 1
      %p354 = por %p352, %p353
      %p355 = scmp.ne.s32.totalorder %s347, %s350
      %p356 = scmp.eq.s32.totalorder %s31, 0
      %p357 = por %p355, %p356
      %p358 = scmp.ne.s32.totalorder %s347, %s350
      %p359 = scmp.eq.s32.totalorder %s36, 1
      %p360 = por %p358, %p359
      %p361 = scmp.ne.s32.totalorder %s350, %s351
      %p362 = scmp.eq.s32.totalorder %s36, 0
      %p363 = por %p361, %p362
      %p364 = scmp.ne.s32.totalorder %s350, %s351
      %p365 = scmp.eq.s32.totalorder %s37, 1
      %p366 = por %p364, %p365
      %p368 = scmp.ne.s32.totalorder %s351, %s367
      %p369 = scmp.eq.s32.totalorder %s37, 0
      %p370 = por %p368, %p369
      %s371 = ssub.s32 %s38, %s50
      %p372 = scmp.eq.s32.totalorder %s371, 0
      %s374 = sadd.s32 %s373, 1
      %s375 = scalar_select %p372, %s373, %s374
      %p378 = pneg %p372
      %p379 = scmp.eq.s32.totalorder %s31, 1
      %p380 = por %p378, %p379
      %p381 = scmp.ne.s32.totalorder %s373, %s376
      %p382 = scmp.eq.s32.totalorder %s31, 0
      %p383 = por %p381, %p382
      %p384 = scmp.ne.s32.totalorder %s373, %s376
      %p385 = scmp.eq.s32.totalorder %s36, 1
      %p386 = por %p384, %p385
      %p387 = scmp.ne.s32.totalorder %s376, %s377
      %p388 = scmp.eq.s32.totalorder %s36, 0
      %p389 = por %p387, %p388
      %p390 = scmp.ne.s32.totalorder %s376, %s377
      %p391 = scmp.eq.s32.totalorder %s37, 1
      %p392 = por %p390, %p391
      %p394 = scmp.ne.s32.totalorder %s377, %s393
      %p395 = scmp.eq.s32.totalorder %s37, 0
      %p396 = por %p394, %p395
      %p397 = scmp.le.s32.totalorder 1, %s31
      %p398 = scmp.lt.s32.totalorder %s31, 3
      %p399 = pnand %p397, %p398
      %p400 = pneg %p399
      // Predicated region
      $region9: #{tpu_custom_call.1} parent=5 // pred_check
        _
      $region10: #{tpu_custom_call.1} parent=5 // pred_check_branch
        %402 = sbr.rel (%p399) target = $region12
      $region11: #{tpu_custom_call.1} parent=5 // pred_region
        %s403 = ssub.s32 %s31, 1
        // Predicated region
        $region13: #{tpu_custom_call.1} parent=11 // pred_check
          %p404 = pneg %p64
        $region14: #{tpu_custom_call.1} parent=11 // pred_check_branch
          %406 = sbr.rel (%p404) target = $region16
        $region15: #{tpu_custom_call.1} parent=11 // pred_region
          %s408 = ssub.s32 64, 64
          %409 = vsyncadd [#allocation4], %s408
          %s411 = sshll.u32 [#allocation3], 4
          %s412 = int_to_ptr.vmem [resolvable:$true] %s411
          %414 = dma.hbm_to_vmem [thread:$0]  %s0, 64, %s412, [#allocation4]
        $region16: #{tpu_custom_call.1} parent=11 // pred_fallthru
          _
        // Predicated region
        $region17: #{tpu_custom_call.1} parent=11 // pred_check
          %p415 = pneg %p85
        $region18: #{tpu_custom_call.1} parent=11 // pred_check_branch
          %417 = sbr.rel (%p415) target = $region20
        $region19: #{tpu_custom_call.1} parent=11 // pred_region
          _
        $region20: #{tpu_custom_call.1} parent=11 // pred_fallthru
          _
        // Predicated region
        $region21: #{tpu_custom_call.1} parent=11 // pred_check
          %p418 = pneg %p106
        $region22: #{tpu_custom_call.1} parent=11 // pred_check_branch
          %420 = sbr.rel (%p418) target = $region24
        $region23: #{tpu_custom_call.1} parent=11 // pred_region
          %s422 = ssub.s32 128, 128
          %423 = vsyncadd [#allocation7], %s422
          %s425 = sshll.u32 [#allocation6], 4
          %s426 = int_to_ptr.vmem [resolvable:$true] %s425
          %428 = dma.hbm_to_vmem [thread:$0]  %s2, 128, %s426, [#allocation7]
        $region24: #{tpu_custom_call.1} parent=11 // pred_fallthru
          _
        // Predicated region
        $region25: #{tpu_custom_call.1} parent=11 // pred_check
          %p429 = pneg %p127
        $region26: #{tpu_custom_call.1} parent=11 // pred_check_branch
          %431 = sbr.rel (%p429) target = $region28
        $region27: #{tpu_custom_call.1} parent=11 // pred_region
          %s433 = ssub.s32 512, 512
          %434 = vsyncadd [#allocation7], %s433
          %s435 = sshll.u32 [#allocation8], 4
          %s436 = int_to_ptr.vmem [resolvable:$true] %s435
          %441 = dma.hbm_to_vmem [thread:$0]  %s3, 512, %s436, [#allocation7], 64, 64, 4
        $region28: #{tpu_custom_call.1} parent=11 // pred_fallthru
          _
        // Predicated region
        $region29: #{tpu_custom_call.1} parent=11 // pred_check
          %p442 = pneg %p148
        $region30: #{tpu_custom_call.1} parent=11 // pred_check_branch
          %444 = sbr.rel (%p442) target = $region32
        $region31: #{tpu_custom_call.1} parent=11 // pred_region
          _
        $region32: #{tpu_custom_call.1} parent=11 // pred_fallthru
          _
        // Predicated region
        $region33: #{tpu_custom_call.1} parent=11 // pred_check
          %p445 = pneg %p169
        $region34: #{tpu_custom_call.1} parent=11 // pred_check_branch
          %447 = sbr.rel (%p445) target = $region36
        $region35: #{tpu_custom_call.1} parent=11 // pred_region
          %s449 = ssub.s32 1024, 1024
          %450 = vsyncadd [#allocation10], %s449
          %s451 = sshll.u32 [#allocation9], 4
          %s452 = int_to_ptr.vmem [resolvable:$true] %s451
          %457 = dma.hbm_to_vmem [thread:$0]  %s5, 1024, %s452, [#allocation10], 64, 64, 4
        $region36: #{tpu_custom_call.1} parent=11 // pred_fallthru
          _
        // Predicated region
        $region37: #{tpu_custom_call.1} parent=11 // pred_check
          %p458 = pneg %p190
        $region38: #{tpu_custom_call.1} parent=11 // pred_check_branch
          %460 = sbr.rel (%p458) target = $region40
        $region39: #{tpu_custom_call.1} parent=11 // pred_region
          %s462 = ssub.s32 16, 16
          %463 = vsyncadd [#allocation10], %s462
          %s465 = sshll.u32 [#allocation11], 4
          %s466 = int_to_ptr.vmem [resolvable:$true] %s465
          %468 = dma.hbm_to_vmem [thread:$0]  %s6, 16, %s466, [#allocation10]
        $region40: #{tpu_custom_call.1} parent=11 // pred_fallthru
          _
        // Predicated region
        $region41: #{tpu_custom_call.1} parent=11 // pred_check
          %p469 = pneg %p211
        $region42: #{tpu_custom_call.1} parent=11 // pred_check_branch
          %471 = sbr.rel (%p469) target = $region44
        $region43: #{tpu_custom_call.1} parent=11 // pred_region
          _
        $region44: #{tpu_custom_call.1} parent=11 // pred_fallthru
          _
        // Predicated region
        $region45: #{tpu_custom_call.1} parent=11 // pred_check
          %p472 = pneg %p232
        $region46: #{tpu_custom_call.1} parent=11 // pred_check_branch
          %474 = sbr.rel (%p472) target = $region48
        $region47: #{tpu_custom_call.1} parent=11 // pred_region
          %s476 = ssub.s32 12288, 12288
          %477 = vsyncadd [#allocation13], %s476
          %s478 = sshll.u32 [#allocation12], 4
          %s479 = int_to_ptr.vmem [resolvable:$true] %s478
          %484 = dma.hbm_to_vmem [thread:$0]  %s8, 12288, %s479, [#allocation13], 256, 256, 16
        $region48: #{tpu_custom_call.1} parent=11 // pred_fallthru
          _
        // Predicated region
        $region49: #{tpu_custom_call.1} parent=11 // pred_check
          %p485 = pneg %p253
        $region50: #{tpu_custom_call.1} parent=11 // pred_check_branch
          %487 = sbr.rel (%p485) target = $region52
        $region51: #{tpu_custom_call.1} parent=11 // pred_region
          _
        $region52: #{tpu_custom_call.1} parent=11 // pred_fallthru
          _
      $region12: #{tpu_custom_call.1} parent=5 // pred_fallthru
        _
      %p488 = scmp.lt.s32.totalorder %s31, 2
      // Predicated region
      $region53: #{tpu_custom_call.1} parent=5 // pred_check
        %p489 = pneg %p488
      $region54: #{tpu_custom_call.1} parent=5 // pred_check_branch
        %491 = sbr.rel (%p489) target = $region56
      $region55: #{tpu_custom_call.1} parent=5 // pred_region
        // Predicated region
        $region57: #{tpu_custom_call.1} parent=55 // pred_check
          %p492 = pneg %p275
        $region58: #{tpu_custom_call.1} parent=55 // pred_check_branch
          %494 = sbr.rel (%p492) target = $region60
        $region59: #{tpu_custom_call.1} parent=55 // pred_region
          %s495 = sand.u32 %s31, 1
          %s496 = scalar_lea.sflag [#allocation4], %s495
          %s497 = sand.u32 %s265, 1
          %s498 = smul.addr %s497, 32
          %s499 = scalar_lea.vmem [#allocation14], %s498
          %s500 = sadd.s32 %s38, %s39
          %s502 = ssub.s32 512, 512
          %503 = vsyncadd %s496, %s502
          %s504 = smul.addr %s500, 8
          %s505 = smul.addr %s504, 64
          %s506 = scalar_lea.hbm %s10, %s505
          %s507 = sshll.u32 %s499, 4
          %s508 = int_to_ptr.vmem [resolvable:$true] %s507
          %513 = dma.hbm_to_vmem [thread:$0]  %s506, 512, %s508, %s496, 128, 128, 8
        $region60: #{tpu_custom_call.1} parent=55 // pred_fallthru
          _
        // Predicated region
        $region61: #{tpu_custom_call.1} parent=55 // pred_check
          %p514 = pneg %p303
        $region62: #{tpu_custom_call.1} parent=55 // pred_check_branch
          %516 = sbr.rel (%p514) target = $region64
        $region63: #{tpu_custom_call.1} parent=55 // pred_region
          %s517 = sadd.s32 %s38, %s39
          %s518 = smul.u32 2, %s517
          %p519 = scmp.lt.s32.totalorder %s518, 3
          %s520 = scalar_select %p519, %s518, 3
          %s521 = scalar_lea.vmem %s11, %s520
          %s522 = sadd.s32 %s38, %s39
          %s523 = smul.u32 2, %s522
        $region64: #{tpu_custom_call.1} parent=55 // pred_fallthru
          _
      $region56: #{tpu_custom_call.1} parent=5 // pred_fallthru
        _
      %p524 = scmp.le.s32.totalorder 1, %s31
      %p525 = scmp.lt.s32.totalorder %s31, 3
      %p526 = pnand %p524, %p525
      %p527 = pneg %p526
      // Predicated region
      $region65: #{tpu_custom_call.1} parent=5 // pred_check
        _
      $region66: #{tpu_custom_call.1} parent=5 // pred_check_branch
        %529 = sbr.rel (%p526) target = $region68
      $region67: #{tpu_custom_call.1} parent=5 // pred_region
        %s530 = ssub.s32 %s31, 1
        // Predicated region
        $region69: #{tpu_custom_call.1} parent=67 // pred_check
          %p531 = pneg %p64
        $region70: #{tpu_custom_call.1} parent=67 // pred_check_branch
          %533 = sbr.rel (%p531) target = $region72
        $region71: #{tpu_custom_call.1} parent=67 // pred_region
          %534 = dma.done [#allocation4], 64
        $region72: #{tpu_custom_call.1} parent=67 // pred_fallthru
          _
        // Predicated region
        $region73: #{tpu_custom_call.1} parent=67 // pred_check
          %p535 = pneg %p106
        $region74: #{tpu_custom_call.1} parent=67 // pred_check_branch
          %537 = sbr.rel (%p535) target = $region76
        $region75: #{tpu_custom_call.1} parent=67 // pred_region
          %538 = dma.done [#allocation7], 128
        $region76: #{tpu_custom_call.1} parent=67 // pred_fallthru
          _
        // Predicated region
        $region77: #{tpu_custom_call.1} parent=67 // pred_check
          %p539 = pneg %p127
        $region78: #{tpu_custom_call.1} parent=67 // pred_check_branch
          %541 = sbr.rel (%p539) target = $region80
        $region79: #{tpu_custom_call.1} parent=67 // pred_region
          %542 = dma.done [#allocation7], 512
        $region80: #{tpu_custom_call.1} parent=67 // pred_fallthru
          _
        // Predicated region
        $region81: #{tpu_custom_call.1} parent=67 // pred_check
          %p543 = pneg %p169
        $region82: #{tpu_custom_call.1} parent=67 // pred_check_branch
          %545 = sbr.rel (%p543) target = $region84
        $region83: #{tpu_custom_call.1} parent=67 // pred_region
          %546 = dma.done [#allocation10], 1024
        $region84: #{tpu_custom_call.1} parent=67 // pred_fallthru
          _
        // Predicated region
        $region85: #{tpu_custom_call.1} parent=67 // pred_check
          %p547 = pneg %p190
        $region86: #{tpu_custom_call.1} parent=67 // pred_check_branch
          %549 = sbr.rel (%p547) target = $region88
        $region87: #{tpu_custom_call.1} parent=67 // pred_region
          %550 = dma.done [#allocation10], 16
        $region88: #{tpu_custom_call.1} parent=67 // pred_fallthru
          _
        // Predicated region
        $region89: #{tpu_custom_call.1} parent=67 // pred_check
          %p551 = pneg %p232
        $region90: #{tpu_custom_call.1} parent=67 // pred_check_branch
          %553 = sbr.rel (%p551) target = $region92
        $region91: #{tpu_custom_call.1} parent=67 // pred_region
          %554 = dma.done [#allocation13], 12288
        $region92: #{tpu_custom_call.1} parent=67 // pred_fallthru
          _
        %s555 = sand.u32 %s36, 1
        %s556 = scalar_lea.sflag [#allocation4], %s555
        %s557 = sand.u32 %s268, 1
        %s558 = smul.addr %s557, 32
        %s559 = scalar_lea.vmem [#allocation14], %s558
        // Predicated region
        $region93: #{tpu_custom_call.1} parent=67 // pred_check
          %p560 = pneg %p281
        $region94: #{tpu_custom_call.1} parent=67 // pred_check_branch
          %562 = sbr.rel (%p560) target = $region96
        $region95: #{tpu_custom_call.1} parent=67 // pred_region
          %563 = dma.done %s556, 512
        $region96: #{tpu_custom_call.1} parent=67 // pred_fallthru
          _
        %p564 = pneg %p64
        %p565 = pneg %p61
        %p566 = pneg %p85
        %p567 = pneg %p82
        %p568 = pneg %p106
        %p569 = pneg %p103
        %p570 = pneg %p127
        %p571 = pneg %p124
        %p572 = pneg %p148
        %p573 = pneg %p145
        %p574 = pneg %p169
        %p575 = pneg %p166
        %p576 = pneg %p190
        %p577 = pneg %p187
        %p578 = pneg %p211
        %p579 = pneg %p208
        %p580 = pneg %p232
        %p581 = pneg %p229
        %p582 = pneg %p253
        %p583 = pneg %p250
        %s584 = sand.u32 %s36, 1
        %s585 = scalar_lea.sflag [#allocation4], %s584
        %s586 = sand.u32 %s268, 1
        %s587 = smul.addr %s586, 32
        %s588 = scalar_lea.vmem [#allocation14], %s587
        %p589 = pneg %p281
        %p590 = pneg %p278
        %s591 = sadd.s32 %s40, %s41
        %s592 = smul.u32 2, %s591
        %p593 = scmp.lt.s32.totalorder %s592, 3
        %s594 = scalar_select %p593, %s592, 3
        %s595 = scalar_lea.vmem %s11, %s594
        %p596 = pneg %p309
        %p597 = pneg %p306
        %p598 = pneg %p337
        %p599 = pneg %p334
        %s600 = sand.u32 %s324, 1
        %s601 = scalar_lea.sflag [#allocation5], %s600
        %s602 = sand.u32 %s324, 1
        %s603 = smul.addr %s602, 16
        %s604 = scalar_lea.vmem [#allocation15], %s603
        %p605 = pneg %p363
        %p606 = pneg %p360
        %s607 = sand.u32 %s36, 1
        %s608 = scalar_lea.sflag [#allocation17], %s607
        %s609 = sand.u32 %s350, 1
        %s610 = smul.addr %s609, 8
        %s611 = scalar_lea.vmem [#allocation16], %s610
        %p612 = pneg %p389
        %p613 = pneg %p386
        %s614 = sand.u32 %s36, 1
        %s615 = scalar_lea.sflag [#allocation17], %s614
        %s616 = sand.u32 %s376, 1
        %s617 = smul.addr %s616, 8
        %s618 = scalar_lea.vmem [#allocation18], %s617
        %s619 = sadd.s32 %s40, %s41
        %s620 = sadd.s32 %s40, %s41
        %s621 = smul.u32 2, %s620
        %p622 = scmp.lt.s32.totalorder %s621, 3
        %s623 = scalar_select %p622, %s621, 3
        %s624 = scalar_lea.vmem %s11, %s623
        %s625 = sadd.s32 %s40, %s41
        %s626 = smul.u32 2, %s625
        %s627 = sadd.s32 %s40, %s41
        %s628 = smul.u32 2, %s627
        %p630 = scmp.eq.s32.totalorder %s41, 0
        // Predicated region
        $region97: #{tpu_custom_call.1} parent=67 // pred_check
          %p631 = pneg %p630
        $region98: #{tpu_custom_call.1} parent=67 // pred_check_branch
          %633 = sbr.rel (%p631) target = $region100
        $region99: #{tpu_custom_call.1} parent=67 // pred_region
          %v634 = vld [vmem:[%s1] sm:$0xff]
          %v635 = vld [vmem:[#allocation6] sm:$0xff]
          %v636 = vld [vmem:[#allocation8] sm:$0xf]
          %v637 = vld [vmem:[#allocation8 + $0x4] sm:$0xf]
          %v638 = vld [vmem:[#allocation8 + $0x8] sm:$0xf]
          %v639 = vld [vmem:[#allocation8 + $0xc] sm:$0xf]
          %v640 = vld [vmem:[#allocation8 + $0x10] sm:$0xf]
          %v641 = vld [vmem:[#allocation8 + $0x14] sm:$0xf]
          %v642 = vld [vmem:[#allocation8 + $0x18] sm:$0xf]
          %v643 = vld [vmem:[#allocation8 + $0x1c] sm:$0xf]
          %v644 = vpack.c.bf16 %v634, %v634
          %v645 = vld [vmem:[%s4] sm:$0xf]
          %v646 = vld [vmem:[%s4 + $0x4] sm:$0xf]
          %v647 = vld [vmem:[%s4 + $0x8] sm:$0xf]
          %v648 = vld [vmem:[%s4 + $0xc] sm:$0xf]
          %v649 = vld [vmem:[%s4 + $0x10] sm:$0xf]
          %v650 = vld [vmem:[%s4 + $0x14] sm:$0xf]
          %v651 = vld [vmem:[%s4 + $0x18] sm:$0xf]
          %v652 = vld [vmem:[%s4 + $0x1c] sm:$0xf]
          %v653 = vld [vmem:[%s4 + $0x20] sm:$0xf]
          %v654 = vld [vmem:[%s4 + $0x24] sm:$0xf]
          %v655 = vld [vmem:[%s4 + $0x28] sm:$0xf]
          %v656 = vld [vmem:[%s4 + $0x2c] sm:$0xf]
          %v657 = vld [vmem:[%s4 + $0x30] sm:$0xf]
          %v658 = vld [vmem:[%s4 + $0x34] sm:$0xf]
          %v659 = vld [vmem:[%s4 + $0x38] sm:$0xf]
          %v660 = vld [vmem:[%s4 + $0x3c] sm:$0xf]
          %v677 = vunpack.c.l.b16 %v645
          %v678 = vunpack.c.l.b16 %v646
          %v679 = vunpack.c.l.b16 %v647
          %v680 = vunpack.c.l.b16 %v648
          %v681 = vunpack.c.l.b16 %v649
          %v682 = vunpack.c.l.b16 %v650
          %v683 = vunpack.c.l.b16 %v651
          %v684 = vunpack.c.l.b16 %v652
          %v685 = vunpack.c.l.b16 %v653
          %v686 = vunpack.c.l.b16 %v654
          %v687 = vunpack.c.l.b16 %v655
          %v688 = vunpack.c.l.b16 %v656
          %v689 = vunpack.c.l.b16 %v657
          %v690 = vunpack.c.l.b16 %v658
          %v691 = vunpack.c.l.b16 %v659
          %v692 = vunpack.c.l.b16 %v660
          %v693 = vpack.c.b16 %v678, %v677
          %v694 = vpack.c.b16 %v680, %v679
          %v695 = vpack.c.b16 %v682, %v681
          %v696 = vpack.c.b16 %v684, %v683
          %v697 = vpack.c.b16 %v686, %v685
          %v698 = vpack.c.b16 %v688, %v687
          %v699 = vpack.c.b16 %v690, %v689
          %v700 = vpack.c.b16 %v692, %v691
          %709 = vmatprep.subr.bf16.mxu0 0
          %710 = vmatpush1.bf16.msra.mxu0 %v700
          %711 = vmatprep.subr.bf16.mxu0 0
          %712 = vmatpush1.bf16.msra.mxu0 %v699
          %713 = vmatprep.subr.bf16.mxu0 0
          %714 = vmatpush1.bf16.msra.mxu0 %v698
          %715 = vmatprep.subr.bf16.mxu0 0
          %716 = vmatpush1.bf16.msra.mxu0 %v697
          %717 = vmatprep.subr.bf16.mxu0 0
          %718 = vmatpush1.bf16.msra.mxu0 %v696
          %719 = vmatprep.subr.bf16.mxu0 0
          %720 = vmatpush1.bf16.msra.mxu0 %v695
          %721 = vmatprep.subr.bf16.mxu0 0
          %722 = vmatpush1.bf16.msra.mxu0 %v694
          %723 = vmatprep.subr.bf16.mxu0 0
          %724 = vmatpush1.bf16.msra.mxu0 %v693
          %725 = vmatprep.subr.bf16.mxu0 0
          %726 = vmatpush2.bf16.msra.mxu0 0
          %727 = vmatprep.subr.bf16.mxu0 0
          %728 = vmatpush2.bf16.msra.mxu0 0
          %729 = vmatprep.subr.bf16.mxu0 0
          %730 = vmatpush2.bf16.msra.mxu0 0
          %731 = vmatprep.subr.bf16.mxu0 0
          %732 = vmatpush2.bf16.msra.mxu0 0
          %733 = vmatprep.subr.bf16.mxu0 0
          %734 = vmatpush2.bf16.msra.mxu0 0
          %735 = vmatprep.subr.bf16.mxu0 0
          %736 = vmatpush2.bf16.msra.mxu0 0
          %737 = vmatprep.subr.bf16.mxu0 0
          %738 = vmatpush2.bf16.msra.mxu0 0
          %739 = vmatprep.subr.bf16.mxu0 0
          %740 = vmatpush2.bf16.msra.mxu0 0
          %741 = vmatprep.mubr.bf16.mxu0 0
          %742 = vmatmul.mubr.bf16.gmra.mxu0 %v644
          %v743 = vpop.f32.mrf.mxu0
          %v744 = vadd.f32 0.0, %v743
          %v745 = vpop.f32.mrf.mxu0
          %v746 = vpop.f32.mrf.mxu0
          %v747 = vpop.f32.mrf.mxu0
          %748 = vdwg.mxu0
          %v749 = vld [vmem:[#allocation9] sm:$0xf]
          %v750 = vld [vmem:[#allocation9 + $0x4] sm:$0xf]
          %v751 = vld [vmem:[#allocation9 + $0x8] sm:$0xf]
          %v752 = vld [vmem:[#allocation9 + $0xc] sm:$0xf]
          %v753 = vld [vmem:[#allocation9 + $0x10] sm:$0xf]
          %v754 = vld [vmem:[#allocation9 + $0x14] sm:$0xf]
          %v755 = vld [vmem:[#allocation9 + $0x18] sm:$0xf]
          %v756 = vld [vmem:[#allocation9 + $0x1c] sm:$0xf]
          %v757 = vld [vmem:[#allocation9 + $0x20] sm:$0xf]
          %v758 = vld [vmem:[#allocation9 + $0x24] sm:$0xf]
          %v759 = vld [vmem:[#allocation9 + $0x28] sm:$0xf]
          %v760 = vld [vmem:[#allocation9 + $0x2c] sm:$0xf]
          %v761 = vld [vmem:[#allocation9 + $0x30] sm:$0xf]
          %v762 = vld [vmem:[#allocation9 + $0x34] sm:$0xf]
          %v763 = vld [vmem:[#allocation9 + $0x38] sm:$0xf]
          %v764 = vld [vmem:[#allocation9 + $0x3c] sm:$0xf]
          %v773 = vunpack.c.l.b16 %v636
          %v774 = vunpack.c.l.b16 %v637
          %v775 = vunpack.c.l.b16 %v638
          %v776 = vunpack.c.l.b16 %v639
          %v777 = vunpack.c.l.b16 %v640
          %v778 = vunpack.c.l.b16 %v641
          %v779 = vunpack.c.l.b16 %v642
          %v780 = vunpack.c.l.b16 %v643
          %v781 = vpack.c.b16 %v774, %v773
          %v782 = vpack.c.b16 %v776, %v775
          %v783 = vpack.c.b16 %v778, %v777
          %v784 = vpack.c.b16 %v780, %v779
          %v805 = vunpack.c.l.b16 %v749
          %v806 = vunpack.c.l.b16 %v750
          %v807 = vunpack.c.l.b16 %v751
          %v808 = vunpack.c.l.b16 %v752
          %v809 = vunpack.c.l.b16 %v753
          %v810 = vunpack.c.l.b16 %v754
          %v811 = vunpack.c.l.b16 %v755
          %v812 = vunpack.c.l.b16 %v756
          %v813 = vunpack.c.l.b16 %v757
          %v814 = vunpack.c.l.b16 %v758
          %v815 = vunpack.c.l.b16 %v759
          %v816 = vunpack.c.l.b16 %v760
          %v817 = vunpack.c.l.b16 %v761
          %v818 = vunpack.c.l.b16 %v762
          %v819 = vunpack.c.l.b16 %v763
          %v820 = vunpack.c.l.b16 %v764
          %v821 = vpack.c.b16 %v806, %v805
          %v822 = vpack.c.b16 %v808, %v807
          %v823 = vpack.c.b16 %v810, %v809
          %v824 = vpack.c.b16 %v812, %v811
          %v825 = vpack.c.b16 %v814, %v813
          %v826 = vpack.c.b16 %v816, %v815
          %v827 = vpack.c.b16 %v818, %v817
          %v828 = vpack.c.b16 %v820, %v819
          %837 = vmatprep.subr.bf16.mxu0 0
          %838 = vmatpush1.bf16.msra.mxu0 %v828
          %839 = vmatprep.subr.bf16.mxu0 0
          %840 = vmatpush1.bf16.msra.mxu0 %v827
          %841 = vmatprep.subr.bf16.mxu0 0
          %842 = vmatpush1.bf16.msra.mxu0 %v826
          %843 = vmatprep.subr.bf16.mxu0 0
          %844 = vmatpush1.bf16.msra.mxu0 %v825
          %845 = vmatprep.subr.bf16.mxu0 0
          %846 = vmatpush1.bf16.msra.mxu0 %v824
          %847 = vmatprep.subr.bf16.mxu0 0
          %848 = vmatpush1.bf16.msra.mxu0 %v823
          %849 = vmatprep.subr.bf16.mxu0 0
          %850 = vmatpush1.bf16.msra.mxu0 %v822
          %851 = vmatprep.subr.bf16.mxu0 0
          %852 = vmatpush1.bf16.msra.mxu0 %v821
          %853 = vmatprep.subr.bf16.mxu0 0
          %854 = vmatpush2.bf16.msra.mxu0 0
          %855 = vmatprep.subr.bf16.mxu0 0
          %856 = vmatpush2.bf16.msra.mxu0 0
          %857 = vmatprep.subr.bf16.mxu0 0
          %858 = vmatpush2.bf16.msra.mxu0 0
          %859 = vmatprep.subr.bf16.mxu0 0
          %860 = vmatpush2.bf16.msra.mxu0 0
          %861 = vmatprep.subr.bf16.mxu0 0
          %862 = vmatpush2.bf16.msra.mxu0 0
          %863 = vmatprep.subr.bf16.mxu0 0
          %864 = vmatpush2.bf16.msra.mxu0 0
          %865 = vmatprep.subr.bf16.mxu0 0
          %866 = vmatpush2.bf16.msra.mxu0 0
          %867 = vmatprep.subr.bf16.mxu0 0
          %868 = vmatpush2.bf16.msra.mxu0 0
          %869 = vmatprep.mubr.bf16.mxu0 0
          %870 = vmatmul.mubr.bf16.gmra.mxu0 %v781
          %v871 = vpop.f32.mrf.mxu0
          %v872 = vadd.f32 0.0, %v871
          %v873 = vpop.f32.mrf.mxu0
          %v874 = vpop.f32.mrf.mxu0
          %v875 = vadd.f32 0.0, %v874
          %v876 = vpop.f32.mrf.mxu0
          %877 = vmatprep.mubr.bf16.mxu0 0
          %878 = vmatmul.mubr.bf16.gmra.mxu0 %v782
          %v879 = vpop.f32.mrf.mxu0
          %v880 = vadd.f32 0.0, %v879
          %v881 = vpop.f32.mrf.mxu0
          %v882 = vpop.f32.mrf.mxu0
          %v883 = vadd.f32 0.0, %v882
          %v884 = vpop.f32.mrf.mxu0
          %885 = vmatprep.mubr.bf16.mxu0 0
          %886 = vmatmul.mubr.bf16.gmra.mxu0 %v783
          %v887 = vpop.f32.mrf.mxu0
          %v888 = vadd.f32 0.0, %v887
          %v889 = vpop.f32.mrf.mxu0
          %v890 = vpop.f32.mrf.mxu0
          %v891 = vadd.f32 0.0, %v890
          %v892 = vpop.f32.mrf.mxu0
          %893 = vmatprep.mubr.bf16.mxu0 0
          %894 = vmatmul.mubr.bf16.gmra.mxu0 %v784
          %v895 = vpop.f32.mrf.mxu0
          %v896 = vadd.f32 0.0, %v895
          %v897 = vpop.f32.mrf.mxu0
          %v898 = vpop.f32.mrf.mxu0
          %v899 = vadd.f32 0.0, %v898
          %v900 = vpop.f32.mrf.mxu0
          %901 = vdwg.mxu0
          %v903 = vcombine.high %v744, %v744
          %v905 = vunpack.c.l.s4 1966171168
          %v906 = vunpack.c.0.s8 %v905
          %v907 = vlaneseq
          %v908 = vshrl.u32 %v907, 7
          %v909 = vsub.s32 %v906, %v908
          %v910 = vrot.slane %v744, %v909
          %v912 = vunpack.c.l.s4 1966171168
          %v913 = vunpack.c.0.s8 %v912
          %v914 = vlaneseq
          %v915 = vshrl.u32 %v914, 7
          %v916 = vsub.s32 %v913, %v915
          %v917 = vrot.slane %v903, %v916
          %v918 = vcombine.high %v910, %v910
          %v919 = vcombine.high %v917, %v917
          %v921 = vunpack.c.l.s4 1966171168
          %v922 = vunpack.c.0.s8 %v921
          %v923 = vlaneseq
          %v924 = vshrl.u32 %v923, 7
          %v925 = vsub.s32 %v922, %v924
          %v926 = vrot.slane %v910, %v925
          %v928 = vunpack.c.l.s4 1966171168
          %v929 = vunpack.c.0.s8 %v928
          %v930 = vlaneseq
          %v931 = vshrl.u32 %v930, 7
          %v932 = vsub.s32 %v929, %v931
          %v933 = vrot.slane %v917, %v932
          %v935 = vunpack.c.l.s4 1966171168
          %v936 = vunpack.c.0.s8 %v935
          %v937 = vlaneseq
          %v938 = vshrl.u32 %v937, 7
          %v939 = vsub.s32 %v936, %v938
          %v940 = vrot.slane %v918, %v939
          %v942 = vunpack.c.l.s4 1966171168
          %v943 = vunpack.c.0.s8 %v942
          %v944 = vlaneseq
          %v945 = vshrl.u32 %v944, 7
          %v946 = vsub.s32 %v943, %v945
          %v947 = vrot.slane %v919, %v946
          %v948 = vcombine.high %v926, %v926
          %v949 = vcombine.high %v933, %v933
          %v950 = vcombine.high %v940, %v940
          %v951 = vcombine.high %v947, %v947
          %v952 = vlaneseq
          %v953 = vshrl.u32 %v952, 7
          %v954 = vsub.s32 0, %v953
          %v955 = vrot.slane %v926, %v954
          %v956 = vlaneseq
          %v957 = vshrl.u32 %v956, 7
          %v958 = vsub.s32 0, %v957
          %v959 = vrot.slane %v940, %v958
          %v960 = vlaneseq
          %v961 = vshrl.u32 %v960, 7
          %v962 = vsub.s32 0, %v961
          %v963 = vrot.slane %v948, %v962
          %v964 = vlaneseq
          %v965 = vshrl.u32 %v964, 7
          %v966 = vsub.s32 0, %v965
          %v967 = vrot.slane %v950, %v966
          %v968 = vlaneseq
          %v969 = vshrl.u32 %v968, 7
          %v970 = vsub.s32 0, %v969
          %v971 = vrot.slane %v933, %v970
          %v972 = vlaneseq
          %v973 = vshrl.u32 %v972, 7
          %v974 = vsub.s32 0, %v973
          %v975 = vrot.slane %v947, %v974
          %v976 = vlaneseq
          %v977 = vshrl.u32 %v976, 7
          %v978 = vsub.s32 0, %v977
          %v979 = vrot.slane %v949, %v978
          %v980 = vlaneseq
          %v981 = vshrl.u32 %v980, 7
          %v982 = vsub.s32 0, %v981
          %v983 = vrot.slane %v951, %v982
          %v992 = vadd.f32 %v872, %v955
          %v993 = vadd.f32 %v875, %v959
          %v994 = vadd.f32 %v880, %v963
          %v995 = vadd.f32 %v883, %v967
          %v996 = vadd.f32 %v888, %v971
          %v997 = vadd.f32 %v891, %v975
          %v998 = vadd.f32 %v896, %v979
          %v999 = vadd.f32 %v899, %v983
          %v1000 = vld [vmem:[#allocation11] sm:$0x1]
          %v1002 = vlaneseq
          %v1003 = vshrl.u32 %v1002, 7
          %v1004 = vsub.s32 0, %v1003
          %v1005 = vrot.slane %v1000, %v1004
          %v1007 = vadd.f32 %v992, %v1005
          %v1008 = vadd.f32 %v993, %v1005
          %v1009 = vadd.f32 %v994, %v1005
          %v1010 = vadd.f32 %v995, %v1005
          %v1011 = vadd.f32 %v996, %v1005
          %v1012 = vadd.f32 %v997, %v1005
          %v1013 = vadd.f32 %v998, %v1005
          %v1014 = vadd.f32 %v999, %v1005
          %v1015 = vtanh.pop %v1007
          %v1016 = vtanh.pop %v1008
          %v1017 = vtanh.pop %v1009
          %v1018 = vtanh.pop %v1010
          %v1019 = vtanh.pop %v1011
          %v1020 = vtanh.pop %v1012
          %v1021 = vtanh.pop %v1013
          %v1022 = vtanh.pop %v1014
          %v1023 = vpack.c.bf16 %v1016, %v1015
          %v1024 = vpack.c.bf16 %v1018, %v1017
          %v1025 = vpack.c.bf16 %v1020, %v1019
          %v1026 = vpack.c.bf16 %v1022, %v1021
          %v1027 = vld [vmem:[%s7] sm:$0xf]
          %v1028 = vld [vmem:[%s7 + $0x4] sm:$0xf]
          %v1029 = vld [vmem:[%s7 + $0x8] sm:$0xf]
          %v1030 = vld [vmem:[%s7 + $0xc] sm:$0xf]
          %v1031 = vld [vmem:[%s7 + $0x10] sm:$0xf]
          %v1032 = vld [vmem:[%s7 + $0x14] sm:$0xf]
          %v1033 = vld [vmem:[%s7 + $0x18] sm:$0xf]
          %v1034 = vld [vmem:[%s7 + $0x1c] sm:$0xf]
          %v1035 = vld [vmem:[%s7 + $0x20] sm:$0xf]
          %v1036 = vld [vmem:[%s7 + $0x24] sm:$0xf]
          %v1037 = vld [vmem:[%s7 + $0x28] sm:$0xf]
          %v1038 = vld [vmem:[%s7 + $0x2c] sm:$0xf]
          %v1039 = vld [vmem:[%s7 + $0x30] sm:$0xf]
          %v1040 = vld [vmem:[%s7 + $0x34] sm:$0xf]
          %v1041 = vld [vmem:[%s7 + $0x38] sm:$0xf]
          %v1042 = vld [vmem:[%s7 + $0x3c] sm:$0xf]
          %v1059 = vunpack.c.l.b16 %v1027
          %v1060 = vunpack.c.l.b16 %v1028
          %v1061 = vunpack.c.l.b16 %v1029
          %v1062 = vunpack.c.l.b16 %v1030
          %v1063 = vunpack.c.l.b16 %v1031
          %v1064 = vunpack.c.l.b16 %v1032
          %v1065 = vunpack.c.l.b16 %v1033
          %v1066 = vunpack.c.l.b16 %v1034
          %v1067 = vunpack.c.l.b16 %v1035
          %v1068 = vunpack.c.l.b16 %v1036
          %v1069 = vunpack.c.l.b16 %v1037
          %v1070 = vunpack.c.l.b16 %v1038
          %v1071 = vunpack.c.l.b16 %v1039
          %v1072 = vunpack.c.l.b16 %v1040
          %v1073 = vunpack.c.l.b16 %v1041
          %v1074 = vunpack.c.l.b16 %v1042
          %v1075 = vpack.c.b16 %v1060, %v1059
          %v1076 = vpack.c.b16 %v1062, %v1061
          %v1077 = vpack.c.b16 %v1064, %v1063
          %v1078 = vpack.c.b16 %v1066, %v1065
          %v1079 = vpack.c.b16 %v1068, %v1067
          %v1080 = vpack.c.b16 %v1070, %v1069
          %v1081 = vpack.c.b16 %v1072, %v1071
          %v1082 = vpack.c.b16 %v1074, %v1073
          %1091 = vmatprep.subr.bf16.mxu0 0
          %1092 = vmatpush1.bf16.msra.mxu0 %v1082
          %1093 = vmatprep.subr.bf16.mxu0 0
          %1094 = vmatpush1.bf16.msra.mxu0 %v1081
          %1095 = vmatprep.subr.bf16.mxu0 0
          %1096 = vmatpush1.bf16.msra.mxu0 %v1080
          %1097 = vmatprep.subr.bf16.mxu0 0
          %1098 = vmatpush1.bf16.msra.mxu0 %v1079
          %1099 = vmatprep.subr.bf16.mxu0 0
          %1100 = vmatpush1.bf16.msra.mxu0 %v1078
          %1101 = vmatprep.subr.bf16.mxu0 0
          %1102 = vmatpush1.bf16.msra.mxu0 %v1077
          %1103 = vmatprep.subr.bf16.mxu0 0
          %1104 = vmatpush1.bf16.msra.mxu0 %v1076
          %1105 = vmatprep.subr.bf16.mxu0 0
          %1106 = vmatpush1.bf16.msra.mxu0 %v1075
          %1107 = vmatprep.subr.bf16.mxu0 0
          %1108 = vmatpush2.bf16.msra.mxu0 0
          %1109 = vmatprep.subr.bf16.mxu0 0
          %1110 = vmatpush2.bf16.msra.mxu0 0
          %1111 = vmatprep.subr.bf16.mxu0 0
          %1112 = vmatpush2.bf16.msra.mxu0 0
          %1113 = vmatprep.subr.bf16.mxu0 0
          %1114 = vmatpush2.bf16.msra.mxu0 0
          %1115 = vmatprep.subr.bf16.mxu0 0
          %1116 = vmatpush2.bf16.msra.mxu0 0
          %1117 = vmatprep.subr.bf16.mxu0 0
          %1118 = vmatpush2.bf16.msra.mxu0 0
          %1119 = vmatprep.subr.bf16.mxu0 0
          %1120 = vmatpush2.bf16.msra.mxu0 0
          %1121 = vmatprep.subr.bf16.mxu0 0
          %1122 = vmatpush2.bf16.msra.mxu0 0
          %1123 = vmatprep.mubr.bf16.mxu0 0
          %1124 = vmatmul.mubr.bf16.gmra.mxu0 %v1023
          %v1125 = vpop.f32.mrf.mxu0
          %v1126 = vadd.f32 0.0, %v1125
          %v1127 = vpop.f32.mrf.mxu0
          %v1128 = vpop.f32.mrf.mxu0
          %v1129 = vadd.f32 0.0, %v1128
          %v1130 = vpop.f32.mrf.mxu0
          %1131 = vmatprep.mubr.bf16.mxu0 0
          %1132 = vmatmul.mubr.bf16.gmra.mxu0 %v1024
          %v1133 = vpop.f32.mrf.mxu0
          %v1134 = vadd.f32 0.0, %v1133
          %v1135 = vpop.f32.mrf.mxu0
          %v1136 = vpop.f32.mrf.mxu0
          %v1137 = vadd.f32 0.0, %v1136
          %v1138 = vpop.f32.mrf.mxu0
          %1139 = vmatprep.mubr.bf16.mxu0 0
          %1140 = vmatmul.mubr.bf16.gmra.mxu0 %v1025
          %v1141 = vpop.f32.mrf.mxu0
          %v1142 = vadd.f32 0.0, %v1141
          %v1143 = vpop.f32.mrf.mxu0
          %v1144 = vpop.f32.mrf.mxu0
          %v1145 = vadd.f32 0.0, %v1144
          %v1146 = vpop.f32.mrf.mxu0
          %1147 = vmatprep.mubr.bf16.mxu0 0
          %1148 = vmatmul.mubr.bf16.gmra.mxu0 %v1026
          %v1149 = vpop.f32.mrf.mxu0
          %v1150 = vadd.f32 0.0, %v1149
          %v1151 = vpop.f32.mrf.mxu0
          %v1152 = vpop.f32.mrf.mxu0
          %v1153 = vadd.f32 0.0, %v1152
          %v1154 = vpop.f32.mrf.mxu0
          %1155 = vdwg.mxu0
          %v1156 = vlaneseq
          %v1157 = vshrl.u32 %v1156, 7
          %vm1158 = vcmp.lt.s32.totalorder %v1157, 6
          %v1159 = vsel %vm1158, %v1126, -inf
          %v1160 = vsel %vm1158, %v1129, -inf
          %v1161 = vsel %vm1158, %v1134, -inf
          %v1162 = vsel %vm1158, %v1137, -inf
          %v1163 = vsel %vm1158, %v1142, -inf
          %v1164 = vsel %vm1158, %v1145, -inf
          %v1165 = vsel %vm1158, %v1150, -inf
          %v1166 = vsel %vm1158, %v1153, -inf
          %vm1167 = vcmask 7168
          %v1168 = vsel %vm1167, %v1159, -inf
          %v1169 = vrot.slane %v1168, 4
          %v1170 = vmax.f32 %v1168, %v1169
          %v1171 = vrot.slane %v1170, 2
          %v1172 = vmax.f32 %v1170, %v1171
          %v1173 = vrot.slane %v1172, 1
          %v1174 = vmax.f32 %v1172, %v1173
          %v1175 = vsel %vm1167, %v1160, -inf
          %v1176 = vrot.slane %v1175, 4
          %v1177 = vmax.f32 %v1175, %v1176
          %v1178 = vrot.slane %v1177, 2
          %v1179 = vmax.f32 %v1177, %v1178
          %v1180 = vrot.slane %v1179, 1
          %v1181 = vmax.f32 %v1179, %v1180
          %v1182 = vsel %vm1167, %v1161, -inf
          %v1183 = vrot.slane %v1182, 4
          %v1184 = vmax.f32 %v1182, %v1183
          %v1185 = vrot.slane %v1184, 2
          %v1186 = vmax.f32 %v1184, %v1185
          %v1187 = vrot.slane %v1186, 1
          %v1188 = vmax.f32 %v1186, %v1187
          %v1189 = vsel %vm1167, %v1162, -inf
          %v1190 = vrot.slane %v1189, 4
          %v1191 = vmax.f32 %v1189, %v1190
          %v1192 = vrot.slane %v1191, 2
          %v1193 = vmax.f32 %v1191, %v1192
          %v1194 = vrot.slane %v1193, 1
          %v1195 = vmax.f32 %v1193, %v1194
          %v1196 = vsel %vm1167, %v1163, -inf
          %v1197 = vrot.slane %v1196, 4
          %v1198 = vmax.f32 %v1196, %v1197
          %v1199 = vrot.slane %v1198, 2
          %v1200 = vmax.f32 %v1198, %v1199
          %v1201 = vrot.slane %v1200, 1
          %v1202 = vmax.f32 %v1200, %v1201
          %v1203 = vsel %vm1167, %v1164, -inf
          %v1204 = vrot.slane %v1203, 4
          %v1205 = vmax.f32 %v1203, %v1204
          %v1206 = vrot.slane %v1205, 2
          %v1207 = vmax.f32 %v1205, %v1206
          %v1208 = vrot.slane %v1207, 1
          %v1209 = vmax.f32 %v1207, %v1208
          %v1210 = vsel %vm1167, %v1165, -inf
          %v1211 = vrot.slane %v1210, 4
          %v1212 = vmax.f32 %v1210, %v1211
          %v1213 = vrot.slane %v1212, 2
          %v1214 = vmax.f32 %v1212, %v1213
          %v1215 = vrot.slane %v1214, 1
          %v1216 = vmax.f32 %v1214, %v1215
          %v1217 = vsel %vm1167, %v1166, -inf
          %v1218 = vrot.slane %v1217, 4
          %v1219 = vmax.f32 %v1217, %v1218
          %v1220 = vrot.slane %v1219, 2
          %v1221 = vmax.f32 %v1219, %v1220
          %v1222 = vrot.slane %v1221, 1
          %v1223 = vmax.f32 %v1221, %v1222
          %v1224 = vsub.f32 %v1159, %v1174
          %v1225 = vsub.f32 %v1160, %v1181
          %v1226 = vsub.f32 %v1161, %v1188
          %v1227 = vsub.f32 %v1162, %v1195
          %v1228 = vsub.f32 %v1163, %v1202
          %v1229 = vsub.f32 %v1164, %v1209
          %v1230 = vsub.f32 %v1165, %v1216
          %v1231 = vsub.f32 %v1166, %v1223
          %v1232 = vmul.f32 %v1224, 1.442695
          %v1233 = vpow.pop %v1232
          %v1234 = vmul.f32 %v1225, 1.442695
          %v1235 = vpow.pop %v1234
          %v1236 = vmul.f32 %v1226, 1.442695
          %v1237 = vpow.pop %v1236
          %v1238 = vmul.f32 %v1227, 1.442695
          %v1239 = vpow.pop %v1238
          %v1240 = vmul.f32 %v1228, 1.442695
          %v1241 = vpow.pop %v1240
          %v1242 = vmul.f32 %v1229, 1.442695
          %v1243 = vpow.pop %v1242
          %v1244 = vmul.f32 %v1230, 1.442695
          %v1245 = vpow.pop %v1244
          %v1246 = vmul.f32 %v1231, 1.442695
          %v1247 = vpow.pop %v1246
          %v1248 = vsel %vm1167, %v1233, 0.0
          %v1249 = vrot.slane %v1248, 4
          %v1250 = vadd.f32 %v1248, %v1249
          %v1251 = vrot.slane %v1250, 2
          %v1252 = vadd.f32 %v1250, %v1251
          %v1253 = vrot.slane %v1252, 1
          %v1254 = vadd.f32 %v1252, %v1253
          %v1255 = vsel %vm1167, %v1235, 0.0
          %v1256 = vrot.slane %v1255, 4
          %v1257 = vadd.f32 %v1255, %v1256
          %v1258 = vrot.slane %v1257, 2
          %v1259 = vadd.f32 %v1257, %v1258
          %v1260 = vrot.slane %v1259, 1
          %v1261 = vadd.f32 %v1259, %v1260
          %v1262 = vsel %vm1167, %v1237, 0.0
          %v1263 = vrot.slane %v1262, 4
          %v1264 = vadd.f32 %v1262, %v1263
          %v1265 = vrot.slane %v1264, 2
          %v1266 = vadd.f32 %v1264, %v1265
          %v1267 = vrot.slane %v1266, 1
          %v1268 = vadd.f32 %v1266, %v1267
          %v1269 = vsel %vm1167, %v1239, 0.0
          %v1270 = vrot.slane %v1269, 4
          %v1271 = vadd.f32 %v1269, %v1270
          %v1272 = vrot.slane %v1271, 2
          %v1273 = vadd.f32 %v1271, %v1272
          %v1274 = vrot.slane %v1273, 1
          %v1275 = vadd.f32 %v1273, %v1274
          %v1276 = vsel %vm1167, %v1241, 0.0
          %v1277 = vrot.slane %v1276, 4
          %v1278 = vadd.f32 %v1276, %v1277
          %v1279 = vrot.slane %v1278, 2
          %v1280 = vadd.f32 %v1278, %v1279
          %v1281 = vrot.slane %v1280, 1
          %v1282 = vadd.f32 %v1280, %v1281
          %v1283 = vsel %vm1167, %v1243, 0.0
          %v1284 = vrot.slane %v1283, 4
          %v1285 = vadd.f32 %v1283, %v1284
          %v1286 = vrot.slane %v1285, 2
          %v1287 = vadd.f32 %v1285, %v1286
          %v1288 = vrot.slane %v1287, 1
          %v1289 = vadd.f32 %v1287, %v1288
          %v1290 = vsel %vm1167, %v1245, 0.0
          %v1291 = vrot.slane %v1290, 4
          %v1292 = vadd.f32 %v1290, %v1291
          %v1293 = vrot.slane %v1292, 2
          %v1294 = vadd.f32 %v1292, %v1293
          %v1295 = vrot.slane %v1294, 1
          %v1296 = vadd.f32 %v1294, %v1295
          %v1297 = vsel %vm1167, %v1247, 0.0
          %v1298 = vrot.slane %v1297, 4
          %v1299 = vadd.f32 %v1297, %v1298
          %v1300 = vrot.slane %v1299, 2
          %v1301 = vadd.f32 %v1299, %v1300
          %v1302 = vrot.slane %v1301, 1
          %v1303 = vadd.f32 %v1301, %v1302
          %v1304 = vrcp.pop %v1254
          %v1305 = vrcp.pop %v1261
          %v1306 = vrcp.pop %v1268
          %v1307 = vrcp.pop %v1275
          %v1308 = vrcp.pop %v1282
          %v1309 = vrcp.pop %v1289
          %v1310 = vrcp.pop %v1296
          %v1311 = vrcp.pop %v1303
          %v1312 = vmul.f32 %v1233, %v1304
          %v1313 = vmul.f32 %v1235, %v1305
          %v1314 = vmul.f32 %v1237, %v1306
          %v1315 = vmul.f32 %v1239, %v1307
          %v1316 = vmul.f32 %v1241, %v1308
          %v1317 = vmul.f32 %v1243, %v1309
          %v1318 = vmul.f32 %v1245, %v1310
          %v1319 = vmul.f32 %v1247, %v1311
          %v1320 = vunpack.c.l.bf16 %v636
          %v1321 = vunpack.c.l.bf16 %v637
          %v1322 = vunpack.c.l.bf16 %v638
          %v1323 = vunpack.c.l.bf16 %v639
          %v1324 = vunpack.c.l.bf16 %v640
          %v1325 = vunpack.c.l.bf16 %v641
          %v1326 = vunpack.c.l.bf16 %v642
          %v1327 = vunpack.c.l.bf16 %v643
          %1329 = vset.pattern.permute.xlu0 0
          %1330 = vperm.xlu0 %1329, %v1312
          %v1331 = vpop.permute.xlu0 %1330
          %1334 = vset.pattern.permute.xlu0 0
          %1335 = vperm.xlu0 %1334, %v1313
          %v1336 = vpop.permute.xlu0 %1335
          %1339 = vset.pattern.permute.xlu0 0
          %1340 = vperm.xlu0 %1339, %v1314
          %v1341 = vpop.permute.xlu0 %1340
          %1344 = vset.pattern.permute.xlu0 0
          %1345 = vperm.xlu0 %1344, %v1315
          %v1346 = vpop.permute.xlu0 %1345
          %1349 = vset.pattern.permute.xlu0 0
          %1350 = vperm.xlu0 %1349, %v1316
          %v1351 = vpop.permute.xlu0 %1350
          %1354 = vset.pattern.permute.xlu0 0
          %1355 = vperm.xlu0 %1354, %v1317
          %v1356 = vpop.permute.xlu0 %1355
          %1359 = vset.pattern.permute.xlu0 0
          %1360 = vperm.xlu0 %1359, %v1318
          %v1361 = vpop.permute.xlu0 %1360
          %1364 = vset.pattern.permute.xlu0 0
          %1365 = vperm.xlu0 %1364, %v1319
          %v1366 = vpop.permute.xlu0 %1365
          %v1368 = vmul.f32 %v1331, %v1320
          %v1369 = vmul.f32 %v1336, %v1321
          %v1370 = vmul.f32 %v1341, %v1322
          %v1371 = vmul.f32 %v1346, %v1323
          %v1372 = vmul.f32 %v1351, %v1324
          %v1373 = vmul.f32 %v1356, %v1325
          %v1374 = vmul.f32 %v1361, %v1326
          %v1375 = vmul.f32 %v1366, %v1327
          %v1376 = vrot.slane %v1368, 4
          %v1377 = vadd.f32 %v1368, %v1376
          %v1378 = vrot.slane %v1377, 2
          %v1379 = vadd.f32 %v1377, %v1378
          %v1380 = vrot.slane %v1379, 1
          %v1381 = vadd.f32 %v1379, %v1380
          %v1382 = vrot.slane %v1369, 4
          %v1383 = vadd.f32 %v1369, %v1382
          %v1384 = vrot.slane %v1383, 2
          %v1385 = vadd.f32 %v1383, %v1384
          %v1386 = vrot.slane %v1385, 1
          %v1387 = vadd.f32 %v1385, %v1386
          %v1388 = vrot.slane %v1370, 4
          %v1389 = vadd.f32 %v1370, %v1388
          %v1390 = vrot.slane %v1389, 2
          %v1391 = vadd.f32 %v1389, %v1390
          %v1392 = vrot.slane %v1391, 1
          %v1393 = vadd.f32 %v1391, %v1392
          %v1394 = vrot.slane %v1371, 4
          %v1395 = vadd.f32 %v1371, %v1394
          %v1396 = vrot.slane %v1395, 2
          %v1397 = vadd.f32 %v1395, %v1396
          %v1398 = vrot.slane %v1397, 1
          %v1399 = vadd.f32 %v1397, %v1398
          %v1400 = vrot.slane %v1372, 4
          %v1401 = vadd.f32 %v1372, %v1400
          %v1402 = vrot.slane %v1401, 2
          %v1403 = vadd.f32 %v1401, %v1402
          %v1404 = vrot.slane %v1403, 1
          %v1405 = vadd.f32 %v1403, %v1404
          %v1406 = vrot.slane %v1373, 4
          %v1407 = vadd.f32 %v1373, %v1406
          %v1408 = vrot.slane %v1407, 2
          %v1409 = vadd.f32 %v1407, %v1408
          %v1410 = vrot.slane %v1409, 1
          %v1411 = vadd.f32 %v1409, %v1410
          %v1412 = vrot.slane %v1374, 4
          %v1413 = vadd.f32 %v1374, %v1412
          %v1414 = vrot.slane %v1413, 2
          %v1415 = vadd.f32 %v1413, %v1414
          %v1416 = vrot.slane %v1415, 1
          %v1417 = vadd.f32 %v1415, %v1416
          %v1418 = vrot.slane %v1375, 4
          %v1419 = vadd.f32 %v1375, %v1418
          %v1420 = vrot.slane %v1419, 2
          %v1421 = vadd.f32 %v1419, %v1420
          %v1422 = vrot.slane %v1421, 1
          %v1423 = vadd.f32 %v1421, %v1422
          %v1424 = vld [vmem:[#allocation3] sm:$0xf]
          %v1425 = vpack.c.bf16 %v1381, %v1381
          %v1426 = vpack.c.bf16 %v1387, %v1387
          %v1427 = vpack.c.bf16 %v1393, %v1393
          %v1428 = vpack.c.bf16 %v1399, %v1399
          %v1429 = vpack.c.bf16 %v1405, %v1405
          %v1430 = vpack.c.bf16 %v1411, %v1411
          %v1431 = vpack.c.bf16 %v1417, %v1417
          %v1432 = vpack.c.bf16 %v1423, %v1423
          %v1441 = vunpack.c.l.b16 %v1425
          %v1442 = vunpack.c.l.b16 %v1426
          %v1443 = vunpack.c.l.b16 %v1427
          %v1444 = vunpack.c.l.b16 %v1428
          %v1445 = vunpack.c.l.b16 %v1429
          %v1446 = vunpack.c.l.b16 %v1430
          %v1447 = vunpack.c.l.b16 %v1431
          %v1448 = vunpack.c.l.b16 %v1432
          %vm1449 = vcmask 1041409
          %v1450 = vsel %vm1449, %v1442, %v1441
          %vm1451 = vcmask 1042434
          %v1452 = vsel %vm1451, %v1443, %v1450
          %vm1453 = vcmask 1043459
          %v1454 = vsel %vm1453, %v1444, %v1452
          %vm1455 = vcmask 1044484
          %v1456 = vsel %vm1455, %v1445, %v1454
          %vm1457 = vcmask 1045509
          %v1458 = vsel %vm1457, %v1446, %v1456
          %vm1459 = vcmask 1046534
          %v1460 = vsel %vm1459, %v1447, %v1458
          %vm1461 = vcmask 1047559
          %v1462 = vsel %vm1461, %v1448, %v1460
          %v1463 = vpack.c.b16 %v1462, %v1462
          %v1465 = vld [vmem:[#allocation12] sm:$0xff]
          %v1466 = vld [vmem:[#allocation12 + $0x8] sm:$0xff]
          %v1467 = vld [vmem:[#allocation12 + $0x10] sm:$0xff]
          %v1468 = vld [vmem:[#allocation12 + $0x18] sm:$0xff]
          %v1469 = vld [vmem:[#allocation12 + $0x20] sm:$0xff]
          %v1470 = vld [vmem:[#allocation12 + $0x28] sm:$0xff]
          %v1471 = vld [vmem:[#allocation12 + $0x30] sm:$0xff]
          %v1472 = vld [vmem:[#allocation12 + $0x38] sm:$0xff]
          %v1473 = vld [vmem:[#allocation12 + $0x40] sm:$0xff]
          %v1474 = vld [vmem:[#allocation12 + $0x48] sm:$0xff]
          %v1475 = vld [vmem:[#allocation12 + $0x50] sm:$0xff]
          %v1476 = vld [vmem:[#allocation12 + $0x58] sm:$0xff]
          %v1477 = vld [vmem:[#allocation12 + $0x60] sm:$0xff]
          %v1478 = vld [vmem:[#allocation12 + $0x68] sm:$0xff]
          %v1479 = vld [vmem:[#allocation12 + $0x70] sm:$0xff]
          %v1480 = vld [vmem:[#allocation12 + $0x78] sm:$0xff]
          %v1481 = vld [vmem:[#allocation12 + $0x80] sm:$0xff]
          %v1482 = vld [vmem:[#allocation12 + $0x88] sm:$0xff]
          %v1483 = vld [vmem:[#allocation12 + $0x90] sm:$0xff]
          %v1484 = vld [vmem:[#allocation12 + $0x98] sm:$0xff]
          %v1485 = vld [vmem:[#allocation12 + $0xa0] sm:$0xff]
          %v1486 = vld [vmem:[#allocation12 + $0xa8] sm:$0xff]
          %v1487 = vld [vmem:[#allocation12 + $0xb0] sm:$0xff]
          %v1488 = vld [vmem:[#allocation12 + $0xb8] sm:$0xff]
          %v1489 = vld [vmem:[#allocation12 + $0xc0] sm:$0xff]
          %v1490 = vld [vmem:[#allocation12 + $0xc8] sm:$0xff]
          %v1491 = vld [vmem:[#allocation12 + $0xd0] sm:$0xff]
          %v1492 = vld [vmem:[#allocation12 + $0xd8] sm:$0xff]
          %v1493 = vld [vmem:[#allocation12 + $0xe0] sm:$0xff]
          %v1494 = vld [vmem:[#allocation12 + $0xe8] sm:$0xff]
          %v1495 = vld [vmem:[#allocation12 + $0xf0] sm:$0xff]
          %v1496 = vld [vmem:[#allocation12 + $0xf8] sm:$0xff]
          %v1497 = vld [vmem:[#allocation12 + $0x100] sm:$0xff]
          %v1498 = vld [vmem:[#allocation12 + $0x108] sm:$0xff]
          %v1499 = vld [vmem:[#allocation12 + $0x110] sm:$0xff]
          %v1500 = vld [vmem:[#allocation12 + $0x118] sm:$0xff]
          %v1501 = vld [vmem:[#allocation12 + $0x120] sm:$0xff]
          %v1502 = vld [vmem:[#allocation12 + $0x128] sm:$0xff]
          %v1503 = vld [vmem:[#allocation12 + $0x130] sm:$0xff]
          %v1504 = vld [vmem:[#allocation12 + $0x138] sm:$0xff]
          %v1505 = vld [vmem:[#allocation12 + $0x140] sm:$0xff]
          %v1506 = vld [vmem:[#allocation12 + $0x148] sm:$0xff]
          %v1507 = vld [vmem:[#allocation12 + $0x150] sm:$0xff]
          %v1508 = vld [vmem:[#allocation12 + $0x158] sm:$0xff]
          %v1509 = vld [vmem:[#allocation12 + $0x160] sm:$0xff]
          %v1510 = vld [vmem:[#allocation12 + $0x168] sm:$0xff]
          %v1511 = vld [vmem:[#allocation12 + $0x170] sm:$0xff]
          %v1512 = vld [vmem:[#allocation12 + $0x178] sm:$0xff]
          %v1513 = vld [vmem:[#allocation12 + $0x180] sm:$0xff]
          %v1514 = vld [vmem:[#allocation12 + $0x188] sm:$0xff]
          %v1515 = vld [vmem:[#allocation12 + $0x190] sm:$0xff]
          %v1516 = vld [vmem:[#allocation12 + $0x198] sm:$0xff]
          %v1517 = vld [vmem:[#allocation12 + $0x1a0] sm:$0xff]
          %v1518 = vld [vmem:[#allocation12 + $0x1a8] sm:$0xff]
          %v1519 = vld [vmem:[#allocation12 + $0x1b0] sm:$0xff]
          %v1520 = vld [vmem:[#allocation12 + $0x1b8] sm:$0xff]
          %v1521 = vld [vmem:[#allocation12 + $0x1c0] sm:$0xff]
          %v1522 = vld [vmem:[#allocation12 + $0x1c8] sm:$0xff]
          %v1523 = vld [vmem:[#allocation12 + $0x1d0] sm:$0xff]
          %v1524 = vld [vmem:[#allocation12 + $0x1d8] sm:$0xff]
          %v1525 = vld [vmem:[#allocation12 + $0x1e0] sm:$0xff]
          %v1526 = vld [vmem:[#allocation12 + $0x1e8] sm:$0xff]
          %v1527 = vld [vmem:[#allocation12 + $0x1f0] sm:$0xff]
          %v1528 = vld [vmem:[#allocation12 + $0x1f8] sm:$0xff]
          %v1529 = vld [vmem:[#allocation12 + $0x200] sm:$0xff]
          %v1530 = vld [vmem:[#allocation12 + $0x208] sm:$0xff]
          %v1531 = vld [vmem:[#allocation12 + $0x210] sm:$0xff]
          %v1532 = vld [vmem:[#allocation12 + $0x218] sm:$0xff]
          %v1533 = vld [vmem:[#allocation12 + $0x220] sm:$0xff]
          %v1534 = vld [vmem:[#allocation12 + $0x228] sm:$0xff]
          %v1535 = vld [vmem:[#allocation12 + $0x230] sm:$0xff]
          %v1536 = vld [vmem:[#allocation12 + $0x238] sm:$0xff]
          %v1537 = vld [vmem:[#allocation12 + $0x240] sm:$0xff]
          %v1538 = vld [vmem:[#allocation12 + $0x248] sm:$0xff]
          %v1539 = vld [vmem:[#allocation12 + $0x250] sm:$0xff]
          %v1540 = vld [vmem:[#allocation12 + $0x258] sm:$0xff]
          %v1541 = vld [vmem:[#allocation12 + $0x260] sm:$0xff]
          %v1542 = vld [vmem:[#allocation12 + $0x268] sm:$0xff]
          %v1543 = vld [vmem:[#allocation12 + $0x270] sm:$0xff]
          %v1544 = vld [vmem:[#allocation12 + $0x278] sm:$0xff]
          %v1545 = vld [vmem:[#allocation12 + $0x280] sm:$0xff]
          %v1546 = vld [vmem:[#allocation12 + $0x288] sm:$0xff]
          %v1547 = vld [vmem:[#allocation12 + $0x290] sm:$0xff]
          %v1548 = vld [vmem:[#allocation12 + $0x298] sm:$0xff]
          %v1549 = vld [vmem:[#allocation12 + $0x2a0] sm:$0xff]
          %v1550 = vld [vmem:[#allocation12 + $0x2a8] sm:$0xff]
          %v1551 = vld [vmem:[#allocation12 + $0x2b0] sm:$0xff]
          %v1552 = vld [vmem:[#allocation12 + $0x2b8] sm:$0xff]
          %v1553 = vld [vmem:[#allocation12 + $0x2c0] sm:$0xff]
          %v1554 = vld [vmem:[#allocation12 + $0x2c8] sm:$0xff]
          %v1555 = vld [vmem:[#allocation12 + $0x2d0] sm:$0xff]
          %v1556 = vld [vmem:[#allocation12 + $0x2d8] sm:$0xff]
          %v1557 = vld [vmem:[#allocation12 + $0x2e0] sm:$0xff]
          %v1558 = vld [vmem:[#allocation12 + $0x2e8] sm:$0xff]
          %v1559 = vld [vmem:[#allocation12 + $0x2f0] sm:$0xff]
          %v1560 = vld [vmem:[#allocation12 + $0x2f8] sm:$0xff]
          %v1561 = vld [vmem:[%s9] sm:$0xf]
          %v1563 = vlaneseq
          %v1564 = vshrl.u32 %v1563, 7
          %v1565 = vsub.s32 0, %v1564
          %v1566 = vrot.slane %v1561, %v1565
          %v1567 = vlaneseq
          %v1568 = vshrl.u32 %v1567, 7
          %v1569 = vsub.s32 1, %v1568
          %v1570 = vrot.slane %v1561, %v1569
          %v1571 = vlaneseq
          %v1572 = vshrl.u32 %v1571, 7
          %v1573 = vsub.s32 2, %v1572
          %v1574 = vrot.slane %v1561, %v1573
          %v1575 = vlaneseq
          %v1576 = vshrl.u32 %v1575, 7
          %v1577 = vsub.s32 3, %v1576
          %v1578 = vrot.slane %v1561, %v1577
          %v1679 = vunpack.c.l.b16 %v1465
          %v1680 = vunpack.c.h.b16 %v1465
          %v1681 = vunpack.c.l.b16 %v1466
          %v1682 = vunpack.c.h.b16 %v1466
          %v1683 = vunpack.c.l.b16 %v1467
          %v1684 = vunpack.c.h.b16 %v1467
          %v1685 = vunpack.c.l.b16 %v1468
          %v1686 = vunpack.c.h.b16 %v1468
          %v1687 = vunpack.c.l.b16 %v1469
          %v1688 = vunpack.c.h.b16 %v1469
          %v1689 = vunpack.c.l.b16 %v1470
          %v1690 = vunpack.c.h.b16 %v1470
          %v1691 = vunpack.c.l.b16 %v1471
          %v1692 = vunpack.c.h.b16 %v1471
          %v1693 = vunpack.c.l.b16 %v1472
          %v1694 = vunpack.c.h.b16 %v1472
          %v1695 = vunpack.c.l.b16 %v1473
          %v1696 = vunpack.c.h.b16 %v1473
          %v1697 = vunpack.c.l.b16 %v1474
          %v1698 = vunpack.c.h.b16 %v1474
          %v1699 = vunpack.c.l.b16 %v1475
          %v1700 = vunpack.c.h.b16 %v1475
          %v1701 = vunpack.c.l.b16 %v1476
          %v1702 = vunpack.c.h.b16 %v1476
          %v1703 = vunpack.c.l.b16 %v1477
          %v1704 = vunpack.c.h.b16 %v1477
          %v1705 = vunpack.c.l.b16 %v1478
          %v1706 = vunpack.c.h.b16 %v1478
          %v1707 = vunpack.c.l.b16 %v1479
          %v1708 = vunpack.c.h.b16 %v1479
          %v1709 = vunpack.c.l.b16 %v1480
          %v1710 = vunpack.c.h.b16 %v1480
          %v1711 = vunpack.c.l.b16 %v1481
          %v1712 = vunpack.c.h.b16 %v1481
          %v1713 = vunpack.c.l.b16 %v1482
          %v1714 = vunpack.c.h.b16 %v1482
          %v1715 = vunpack.c.l.b16 %v1483
          %v1716 = vunpack.c.h.b16 %v1483
          %v1717 = vunpack.c.l.b16 %v1484
          %v1718 = vunpack.c.h.b16 %v1484
          %v1719 = vunpack.c.l.b16 %v1485
          %v1720 = vunpack.c.h.b16 %v1485
          %v1721 = vunpack.c.l.b16 %v1486
          %v1722 = vunpack.c.h.b16 %v1486
          %v1723 = vunpack.c.l.b16 %v1487
          %v1724 = vunpack.c.h.b16 %v1487
          %v1725 = vunpack.c.l.b16 %v1488
          %v1726 = vunpack.c.h.b16 %v1488
          %v1727 = vunpack.c.l.b16 %v1489
          %v1728 = vunpack.c.h.b16 %v1489
          %v1729 = vunpack.c.l.b16 %v1490
          %v1730 = vunpack.c.h.b16 %v1490
          %v1731 = vunpack.c.l.b16 %v1491
          %v1732 = vunpack.c.h.b16 %v1491
          %v1733 = vunpack.c.l.b16 %v1492
          %v1734 = vunpack.c.h.b16 %v1492
          %v1735 = vunpack.c.l.b16 %v1493
          %v1736 = vunpack.c.h.b16 %v1493
          %v1737 = vunpack.c.l.b16 %v1494
          %v1738 = vunpack.c.h.b16 %v1494
          %v1739 = vunpack.c.l.b16 %v1495
          %v1740 = vunpack.c.h.b16 %v1495
          %v1741 = vunpack.c.l.b16 %v1496
          %v1742 = vunpack.c.h.b16 %v1496
          %v1743 = vunpack.c.l.b16 %v1497
          %v1744 = vunpack.c.h.b16 %v1497
          %v1745 = vunpack.c.l.b16 %v1498
          %v1746 = vunpack.c.h.b16 %v1498
          %v1747 = vunpack.c.l.b16 %v1499
          %v1748 = vunpack.c.h.b16 %v1499
          %v1749 = vunpack.c.l.b16 %v1500
          %v1750 = vunpack.c.h.b16 %v1500
          %v1751 = vunpack.c.l.b16 %v1501
          %v1752 = vunpack.c.h.b16 %v1501
          %v1753 = vunpack.c.l.b16 %v1502
          %v1754 = vunpack.c.h.b16 %v1502
          %v1755 = vunpack.c.l.b16 %v1503
          %v1756 = vunpack.c.h.b16 %v1503
          %v1757 = vunpack.c.l.b16 %v1504
          %v1758 = vunpack.c.h.b16 %v1504
          %v1759 = vunpack.c.l.b16 %v1505
          %v1760 = vunpack.c.h.b16 %v1505
          %v1761 = vunpack.c.l.b16 %v1506
          %v1762 = vunpack.c.h.b16 %v1506
          %v1763 = vunpack.c.l.b16 %v1507
          %v1764 = vunpack.c.h.b16 %v1507
          %v1765 = vunpack.c.l.b16 %v1508
          %v1766 = vunpack.c.h.b16 %v1508
          %v1767 = vunpack.c.l.b16 %v1509
          %v1768 = vunpack.c.h.b16 %v1509
          %v1769 = vunpack.c.l.b16 %v1510
          %v1770 = vunpack.c.h.b16 %v1510
          %v1771 = vunpack.c.l.b16 %v1511
          %v1772 = vunpack.c.h.b16 %v1511
          %v1773 = vunpack.c.l.b16 %v1512
          %v1774 = vunpack.c.h.b16 %v1512
          %v1775 = vunpack.c.l.b16 %v1513
          %v1776 = vunpack.c.h.b16 %v1513
          %v1777 = vunpack.c.l.b16 %v1514
          %v1778 = vunpack.c.h.b16 %v1514
          %v1779 = vunpack.c.l.b16 %v1515
          %v1780 = vunpack.c.h.b16 %v1515
          %v1781 = vunpack.c.l.b16 %v1516
          %v1782 = vunpack.c.h.b16 %v1516
          %v1783 = vunpack.c.l.b16 %v1517
          %v1784 = vunpack.c.h.b16 %v1517
          %v1785 = vunpack.c.l.b16 %v1518
          %v1786 = vunpack.c.h.b16 %v1518
          %v1787 = vunpack.c.l.b16 %v1519
          %v1788 = vunpack.c.h.b16 %v1519
          %v1789 = vunpack.c.l.b16 %v1520
          %v1790 = vunpack.c.h.b16 %v1520
          %v1791 = vunpack.c.l.b16 %v1521
          %v1792 = vunpack.c.h.b16 %v1521
          %v1793 = vunpack.c.l.b16 %v1522
          %v1794 = vunpack.c.h.b16 %v1522
          %v1795 = vunpack.c.l.b16 %v1523
          %v1796 = vunpack.c.h.b16 %v1523
          %v1797 = vunpack.c.l.b16 %v1524
          %v1798 = vunpack.c.h.b16 %v1524
          %v1799 = vunpack.c.l.b16 %v1525
          %v1800 = vunpack.c.h.b16 %v1525
          %v1801 = vunpack.c.l.b16 %v1526
          %v1802 = vunpack.c.h.b16 %v1526
          %v1803 = vunpack.c.l.b16 %v1527
          %v1804 = vunpack.c.h.b16 %v1527
          %v1805 = vunpack.c.l.b16 %v1528
          %v1806 = vunpack.c.h.b16 %v1528
          %v1807 = vunpack.c.l.b16 %v1529
          %v1808 = vunpack.c.h.b16 %v1529
          %v1809 = vunpack.c.l.b16 %v1530
          %v1810 = vunpack.c.h.b16 %v1530
          %v1811 = vunpack.c.l.b16 %v1531
          %v1812 = vunpack.c.h.b16 %v1531
          %v1813 = vunpack.c.l.b16 %v1532
          %v1814 = vunpack.c.h.b16 %v1532
          %v1815 = vunpack.c.l.b16 %v1533
          %v1816 = vunpack.c.h.b16 %v1533
          %v1817 = vunpack.c.l.b16 %v1534
          %v1818 = vunpack.c.h.b16 %v1534
          %v1819 = vunpack.c.l.b16 %v1535
          %v1820 = vunpack.c.h.b16 %v1535
          %v1821 = vunpack.c.l.b16 %v1536
          %v1822 = vunpack.c.h.b16 %v1536
          %v1823 = vunpack.c.l.b16 %v1537
          %v1824 = vunpack.c.h.b16 %v1537
          %v1825 = vunpack.c.l.b16 %v1538
          %v1826 = vunpack.c.h.b16 %v1538
          %v1827 = vunpack.c.l.b16 %v1539
          %v1828 = vunpack.c.h.b16 %v1539
          %v1829 = vunpack.c.l.b16 %v1540
          %v1830 = vunpack.c.h.b16 %v1540
          %v1831 = vunpack.c.l.b16 %v1541
          %v1832 = vunpack.c.h.b16 %v1541
          %v1833 = vunpack.c.l.b16 %v1542
          %v1834 = vunpack.c.h.b16 %v1542
          %v1835 = vunpack.c.l.b16 %v1543
          %v1836 = vunpack.c.h.b16 %v1543
          %v1837 = vunpack.c.l.b16 %v1544
          %v1838 = vunpack.c.h.b16 %v1544
          %v1839 = vunpack.c.l.b16 %v1545
          %v1840 = vunpack.c.h.b16 %v1545
          %v1841 = vunpack.c.l.b16 %v1546
          %v1842 = vunpack.c.h.b16 %v1546
          %v1843 = vunpack.c.l.b16 %v1547
          %v1844 = vunpack.c.h.b16 %v1547
          %v1845 = vunpack.c.l.b16 %v1548
          %v1846 = vunpack.c.h.b16 %v1548
          %v1847 = vunpack.c.l.b16 %v1549
          %v1848 = vunpack.c.h.b16 %v1549
          %v1849 = vunpack.c.l.b16 %v1550
          %v1850 = vunpack.c.h.b16 %v1550
          %v1851 = vunpack.c.l.b16 %v1551
          %v1852 = vunpack.c.h.b16 %v1551
          %v1853 = vunpack.c.l.b16 %v1552
          %v1854 = vunpack.c.h.b16 %v1552
          %v1855 = vunpack.c.l.b16 %v1553
          %v1856 = vunpack.c.h.b16 %v1553
          %v1857 = vunpack.c.l.b16 %v1554
          %v1858 = vunpack.c.h.b16 %v1554
          %v1859 = vunpack.c.l.b16 %v1555
          %v1860 = vunpack.c.h.b16 %v1555
          %v1861 = vunpack.c.l.b16 %v1556
          %v1862 = vunpack.c.h.b16 %v1556
          %v1863 = vunpack.c.l.b16 %v1557
          %v1864 = vunpack.c.h.b16 %v1557
          %v1865 = vunpack.c.l.b16 %v1558
          %v1866 = vunpack.c.h.b16 %v1558
          %v1867 = vunpack.c.l.b16 %v1559
          %v1868 = vunpack.c.h.b16 %v1559
          %v1869 = vunpack.c.l.b16 %v1560
          %v1870 = vunpack.c.h.b16 %v1560
          %v1871 = vpack.c.b16 %v1683, %v1679
          %v1872 = vpack.c.b16 %v1684, %v1680
          %v1873 = vpack.c.b16 %v1685, %v1681
          %v1874 = vpack.c.b16 %v1686, %v1682
          %v1875 = vpack.c.b16 %v1691, %v1687
          %v1876 = vpack.c.b16 %v1692, %v1688
          %v1877 = vpack.c.b16 %v1693, %v1689
          %v1878 = vpack.c.b16 %v1694, %v1690
          %v1879 = vpack.c.b16 %v1699, %v1695
          %v1880 = vpack.c.b16 %v1700, %v1696
          %v1881 = vpack.c.b16 %v1701, %v1697
          %v1882 = vpack.c.b16 %v1702, %v1698
          %v1883 = vpack.c.b16 %v1707, %v1703
          %v1884 = vpack.c.b16 %v1708, %v1704
          %v1885 = vpack.c.b16 %v1709, %v1705
          %v1886 = vpack.c.b16 %v1710, %v1706
          %v1887 = vpack.c.b16 %v1715, %v1711
          %v1888 = vpack.c.b16 %v1716, %v1712
          %v1889 = vpack.c.b16 %v1717, %v1713
          %v1890 = vpack.c.b16 %v1718, %v1714
          %v1891 = vpack.c.b16 %v1723, %v1719
          %v1892 = vpack.c.b16 %v1724, %v1720
          %v1893 = vpack.c.b16 %v1725, %v1721
          %v1894 = vpack.c.b16 %v1726, %v1722
          %v1895 = vpack.c.b16 %v1731, %v1727
          %v1896 = vpack.c.b16 %v1732, %v1728
          %v1897 = vpack.c.b16 %v1733, %v1729
          %v1898 = vpack.c.b16 %v1734, %v1730
          %v1899 = vpack.c.b16 %v1739, %v1735
          %v1900 = vpack.c.b16 %v1740, %v1736
          %v1901 = vpack.c.b16 %v1741, %v1737
          %v1902 = vpack.c.b16 %v1742, %v1738
          %v1903 = vpack.c.b16 %v1747, %v1743
          %v1904 = vpack.c.b16 %v1748, %v1744
          %v1905 = vpack.c.b16 %v1749, %v1745
          %v1906 = vpack.c.b16 %v1750, %v1746
          %v1907 = vpack.c.b16 %v1755, %v1751
          %v1908 = vpack.c.b16 %v1756, %v1752
          %v1909 = vpack.c.b16 %v1757, %v1753
          %v1910 = vpack.c.b16 %v1758, %v1754
          %v1911 = vpack.c.b16 %v1763, %v1759
          %v1912 = vpack.c.b16 %v1764, %v1760
          %v1913 = vpack.c.b16 %v1765, %v1761
          %v1914 = vpack.c.b16 %v1766, %v1762
          %v1915 = vpack.c.b16 %v1771, %v1767
          %v1916 = vpack.c.b16 %v1772, %v1768
          %v1917 = vpack.c.b16 %v1773, %v1769
          %v1918 = vpack.c.b16 %v1774, %v1770
          %v1919 = vpack.c.b16 %v1779, %v1775
          %v1920 = vpack.c.b16 %v1780, %v1776
          %v1921 = vpack.c.b16 %v1781, %v1777
          %v1922 = vpack.c.b16 %v1782, %v1778
          %v1923 = vpack.c.b16 %v1787, %v1783
          %v1924 = vpack.c.b16 %v1788, %v1784
          %v1925 = vpack.c.b16 %v1789, %v1785
          %v1926 = vpack.c.b16 %v1790, %v1786
          %v1927 = vpack.c.b16 %v1795, %v1791
          %v1928 = vpack.c.b16 %v1796, %v1792
          %v1929 = vpack.c.b16 %v1797, %v1793
          %v1930 = vpack.c.b16 %v1798, %v1794
          %v1931 = vpack.c.b16 %v1803, %v1799
          %v1932 = vpack.c.b16 %v1804, %v1800
          %v1933 = vpack.c.b16 %v1805, %v1801
          %v1934 = vpack.c.b16 %v1806, %v1802
          %v1935 = vpack.c.b16 %v1811, %v1807
          %v1936 = vpack.c.b16 %v1812, %v1808
          %v1937 = vpack.c.b16 %v1813, %v1809
          %v1938 = vpack.c.b16 %v1814, %v1810
          %v1939 = vpack.c.b16 %v1819, %v1815
          %v1940 = vpack.c.b16 %v1820, %v1816
          %v1941 = vpack.c.b16 %v1821, %v1817
          %v1942 = vpack.c.b16 %v1822, %v1818
          %v1943 = vpack.c.b16 %v1827, %v1823
          %v1944 = vpack.c.b16 %v1828, %v1824
          %v1945 = vpack.c.b16 %v1829, %v1825
          %v1946 = vpack.c.b16 %v1830, %v1826
          %v1947 = vpack.c.b16 %v1835, %v1831
          %v1948 = vpack.c.b16 %v1836, %v1832
          %v1949 = vpack.c.b16 %v1837, %v1833
          %v1950 = vpack.c.b16 %v1838, %v1834
          %v1951 = vpack.c.b16 %v1843, %v1839
          %v1952 = vpack.c.b16 %v1844, %v1840
          %v1953 = vpack.c.b16 %v1845, %v1841
          %v1954 = vpack.c.b16 %v1846, %v1842
          %v1955 = vpack.c.b16 %v1851, %v1847
          %v1956 = vpack.c.b16 %v1852, %v1848
          %v1957 = vpack.c.b16 %v1853, %v1849
          %v1958 = vpack.c.b16 %v1854, %v1850
          %v1959 = vpack.c.b16 %v1859, %v1855
          %v1960 = vpack.c.b16 %v1860, %v1856
          %v1961 = vpack.c.b16 %v1861, %v1857
          %v1962 = vpack.c.b16 %v1862, %v1858
          %v1963 = vpack.c.b16 %v1867, %v1863
          %v1964 = vpack.c.b16 %v1868, %v1864
          %v1965 = vpack.c.b16 %v1869, %v1865
          %v1966 = vpack.c.b16 %v1870, %v1866
          %2063 = vmatprep.subr.bf16.mxu0 %v1900
          %2064 = vmatpush1.bf16.msra.mxu0 %v1899
          %2065 = vmatprep.subr.bf16.mxu0 %v1896
          %2066 = vmatpush1.bf16.msra.mxu0 %v1895
          %2067 = vmatprep.subr.bf16.mxu0 %v1892
          %2068 = vmatpush1.bf16.msra.mxu0 %v1891
          %2069 = vmatprep.subr.bf16.mxu0 %v1888
          %2070 = vmatpush1.bf16.msra.mxu0 %v1887
          %2071 = vmatprep.subr.bf16.mxu0 %v1884
          %2072 = vmatpush1.bf16.msra.mxu0 %v1883
          %2073 = vmatprep.subr.bf16.mxu0 %v1880
          %2074 = vmatpush1.bf16.msra.mxu0 %v1879
          %2075 = vmatprep.subr.bf16.mxu0 %v1876
          %2076 = vmatpush1.bf16.msra.mxu0 %v1875
          %2077 = vmatprep.subr.bf16.mxu0 %v1872
          %2078 = vmatpush1.bf16.msra.mxu0 %v1871
          %2079 = vmatprep.subr.bf16.mxu0 %v1932
          %2080 = vmatpush2.bf16.msra.mxu0 %v1931
          %2081 = vmatprep.subr.bf16.mxu0 %v1928
          %2082 = vmatpush2.bf16.msra.mxu0 %v1927
          %2083 = vmatprep.subr.bf16.mxu0 %v1924
          %2084 = vmatpush2.bf16.msra.mxu0 %v1923
          %2085 = vmatprep.subr.bf16.mxu0 %v1920
          %2086 = vmatpush2.bf16.msra.mxu0 %v1919
          %2087 = vmatprep.subr.bf16.mxu0 %v1916
          %2088 = vmatpush2.bf16.msra.mxu0 %v1915
          %2089 = vmatprep.subr.bf16.mxu0 %v1912
          %2090 = vmatpush2.bf16.msra.mxu0 %v1911
          %2091 = vmatprep.subr.bf16.mxu0 %v1908
          %2092 = vmatpush2.bf16.msra.mxu0 %v1907
          %2093 = vmatprep.subr.bf16.mxu0 %v1904
          %2094 = vmatpush2.bf16.msra.mxu0 %v1903
          %2095 = vmatprep.mubr.bf16.mxu0 %v1463
          %2096 = vmatmul.mubr.bf16.gmra.mxu0 %v1424
          %v2097 = vpop.f32.mrf.mxu0
          %v2098 = vadd.f32 %v1566, %v2097
          %v2099 = vpop.f32.mrf.mxu0
          %v2100 = vadd.f32 %v1570, %v2099
          %v2101 = vpop.f32.mrf.mxu0
          %v2102 = vpop.f32.mrf.mxu0
          %2103 = vdwg.mxu0
          %2104 = vmatprep.subr.bf16.mxu0 %v1964
          %2105 = vmatpush1.bf16.msra.mxu0 %v1963
          %2106 = vmatprep.subr.bf16.mxu0 %v1960
          %2107 = vmatpush1.bf16.msra.mxu0 %v1959
          %2108 = vmatprep.subr.bf16.mxu0 %v1956
          %2109 = vmatpush1.bf16.msra.mxu0 %v1955
          %2110 = vmatprep.subr.bf16.mxu0 %v1952
          %2111 = vmatpush1.bf16.msra.mxu0 %v1951
          %2112 = vmatprep.subr.bf16.mxu0 %v1948
          %2113 = vmatpush1.bf16.msra.mxu0 %v1947
          %2114 = vmatprep.subr.bf16.mxu0 %v1944
          %2115 = vmatpush1.bf16.msra.mxu0 %v1943
          %2116 = vmatprep.subr.bf16.mxu0 %v1940
          %2117 = vmatpush1.bf16.msra.mxu0 %v1939
          %2118 = vmatprep.subr.bf16.mxu0 %v1936
          %2119 = vmatpush1.bf16.msra.mxu0 %v1935
          %2120 = vmatprep.subr.bf16.mxu0 0
          %2121 = vmatpush2.bf16.msra.mxu0 0
          %2122 = vmatprep.subr.bf16.mxu0 0
          %2123 = vmatpush2.bf16.msra.mxu0 0
          %2124 = vmatprep.subr.bf16.mxu0 0
          %2125 = vmatpush2.bf16.msra.mxu0 0
          %2126 = vmatprep.subr.bf16.mxu0 0
          %2127 = vmatpush2.bf16.msra.mxu0 0
          %2128 = vmatprep.subr.bf16.mxu0 0
          %2129 = vmatpush2.bf16.msra.mxu0 0
          %2130 = vmatprep.subr.bf16.mxu0 0
          %2131 = vmatpush2.bf16.msra.mxu0 0
          %2132 = vmatprep.subr.bf16.mxu0 0
          %2133 = vmatpush2.bf16.msra.mxu0 0
          %2134 = vmatprep.subr.bf16.mxu0 0
          %2135 = vmatpush2.bf16.msra.mxu0 0
          %2136 = vmatprep.mubr.bf16.mxu0 0
          %2137 = vmatmul.mubr.bf16.gmra.mxu0 %v644
          %v2138 = vpop.f32.mrf.mxu0
          %v2139 = vadd.f32 %v2098, %v2138
          %v2140 = vpop.f32.mrf.mxu0
          %v2141 = vadd.f32 %v2100, %v2140
          %v2142 = vpop.f32.mrf.mxu0
          %v2143 = vpop.f32.mrf.mxu0
          %2144 = vdwg.mxu0
          %2145 = vmatprep.subr.bf16.mxu0 %v1902
          %2146 = vmatpush1.bf16.msra.mxu0 %v1901
          %2147 = vmatprep.subr.bf16.mxu0 %v1898
          %2148 = vmatpush1.bf16.msra.mxu0 %v1897
          %2149 = vmatprep.subr.bf16.mxu0 %v1894
          %2150 = vmatpush1.bf16.msra.mxu0 %v1893
          %2151 = vmatprep.subr.bf16.mxu0 %v1890
          %2152 = vmatpush1.bf16.msra.mxu0 %v1889
          %2153 = vmatprep.subr.bf16.mxu0 %v1886
          %2154 = vmatpush1.bf16.msra.mxu0 %v1885
          %2155 = vmatprep.subr.bf16.mxu0 %v1882
          %2156 = vmatpush1.bf16.msra.mxu0 %v1881
          %2157 = vmatprep.subr.bf16.mxu0 %v1878
          %2158 = vmatpush1.bf16.msra.mxu0 %v1877
          %2159 = vmatprep.subr.bf16.mxu0 %v1874
          %2160 = vmatpush1.bf16.msra.mxu0 %v1873
          %2161 = vmatprep.subr.bf16.mxu0 %v1934
          %2162 = vmatpush2.bf16.msra.mxu0 %v1933
          %2163 = vmatprep.subr.bf16.mxu0 %v1930
          %2164 = vmatpush2.bf16.msra.mxu0 %v1929
          %2165 = vmatprep.subr.bf16.mxu0 %v1926
          %2166 = vmatpush2.bf16.msra.mxu0 %v1925
          %2167 = vmatprep.subr.bf16.mxu0 %v1922
          %2168 = vmatpush2.bf16.msra.mxu0 %v1921
          %2169 = vmatprep.subr.bf16.mxu0 %v1918
          %2170 = vmatpush2.bf16.msra.mxu0 %v1917
          %2171 = vmatprep.subr.bf16.mxu0 %v1914
          %2172 = vmatpush2.bf16.msra.mxu0 %v1913
          %2173 = vmatprep.subr.bf16.mxu0 %v1910
          %2174 = vmatpush2.bf16.msra.mxu0 %v1909
          %2175 = vmatprep.subr.bf16.mxu0 %v1906
          %2176 = vmatpush2.bf16.msra.mxu0 %v1905
          %2177 = vmatprep.mubr.bf16.mxu0 %v1463
          %2178 = vmatmul.mubr.bf16.gmra.mxu0 %v1424
          %v2179 = vpop.f32.mrf.mxu0
          %v2180 = vadd.f32 %v1574, %v2179
          %v2181 = vpop.f32.mrf.mxu0
          %v2182 = vadd.f32 %v1578, %v2181
          %v2183 = vpop.f32.mrf.mxu0
          %v2184 = vpop.f32.mrf.mxu0
          %2185 = vdwg.mxu0
          %2186 = vmatprep.subr.bf16.mxu0 %v1966
          %2187 = vmatpush1.bf16.msra.mxu0 %v1965
          %2188 = vmatprep.subr.bf16.mxu0 %v1962
          %2189 = vmatpush1.bf16.msra.mxu0 %v1961
          %2190 = vmatprep.subr.bf16.mxu0 %v1958
          %2191 = vmatpush1.bf16.msra.mxu0 %v1957
          %2192 = vmatprep.subr.bf16.mxu0 %v1954
          %2193 = vmatpush1.bf16.msra.mxu0 %v1953
          %2194 = vmatprep.subr.bf16.mxu0 %v1950
          %2195 = vmatpush1.bf16.msra.mxu0 %v1949
          %2196 = vmatprep.subr.bf16.mxu0 %v1946
          %2197 = vmatpush1.bf16.msra.mxu0 %v1945
          %2198 = vmatprep.subr.bf16.mxu0 %v1942
          %2199 = vmatpush1.bf16.msra.mxu0 %v1941
          %2200 = vmatprep.subr.bf16.mxu0 %v1938
          %2201 = vmatpush1.bf16.msra.mxu0 %v1937
          %2202 = vmatprep.subr.bf16.mxu0 0
          %2203 = vmatpush2.bf16.msra.mxu0 0
          %2204 = vmatprep.subr.bf16.mxu0 0
          %2205 = vmatpush2.bf16.msra.mxu0 0
          %2206 = vmatprep.subr.bf16.mxu0 0
          %2207 = vmatpush2.bf16.msra.mxu0 0
          %2208 = vmatprep.subr.bf16.mxu0 0
          %2209 = vmatpush2.bf16.msra.mxu0 0
          %2210 = vmatprep.subr.bf16.mxu0 0
          %2211 = vmatpush2.bf16.msra.mxu0 0
          %2212 = vmatprep.subr.bf16.mxu0 0
          %2213 = vmatpush2.bf16.msra.mxu0 0
          %2214 = vmatprep.subr.bf16.mxu0 0
          %2215 = vmatpush2.bf16.msra.mxu0 0
          %2216 = vmatprep.subr.bf16.mxu0 0
          %2217 = vmatpush2.bf16.msra.mxu0 0
          %2218 = vmatprep.mubr.bf16.mxu0 0
          %2219 = vmatmul.mubr.bf16.gmra.mxu0 %v644
          %v2220 = vpop.f32.mrf.mxu0
          %v2221 = vadd.f32 %v2180, %v2220
          %v2222 = vpop.f32.mrf.mxu0
          %v2223 = vadd.f32 %v2182, %v2222
          %v2224 = vpop.f32.mrf.mxu0
          %v2225 = vpop.f32.mrf.mxu0
          %2226 = vdwg.mxu0
          %v2227 = vxor.u32 %v2139, 2147483648
          %v2228 = vmul.f32 %v2227, 1.442695
          %v2229 = vpow.pop %v2228
          %v2230 = vadd.f32 %v2229, 1.0
          %v2231 = vrcp.pop %v2230
          %v2232 = vmul.f32 1.0, %v2231
          %v2233 = vxor.u32 %v2141, 2147483648
          %v2234 = vmul.f32 %v2233, 1.442695
          %v2235 = vpow.pop %v2234
          %v2236 = vadd.f32 %v2235, 1.0
          %v2237 = vrcp.pop %v2236
          %v2238 = vmul.f32 1.0, %v2237
          %v2239 = vtanh.pop %v2221
          %v2240 = vxor.u32 %v2223, 2147483648
          %v2241 = vmul.f32 %v2240, 1.442695
          %v2242 = vpow.pop %v2241
          %v2243 = vadd.f32 %v2242, 1.0
          %v2244 = vrcp.pop %v2243
          %v2245 = vmul.f32 1.0, %v2244
          %v2246 = vmul.f32 %v2238, %v635
          %v2247 = vmul.f32 %v2232, %v2239
          %v2248 = vadd.f32 %v2246, %v2247
          %v2249 = vtanh.pop %v2248
          %v2250 = vmul.f32 %v2245, %v2249
          %2251 = vst [vmem:[%s611] sm:$0xff] %v2250
          %2252 = vst [vmem:[%s618] sm:$0xff] %v2248
          %v2253 = vpack.c.bf16 %v2250, %v2250
          %vm2254 = vcmask 257024
          %2255 = vst.msk [vmem:[#allocation2] sm:$0xf] %vm2254, %v2253
        $region100: #{tpu_custom_call.1} parent=67 // pred_fallthru
          _
        %v2256 = vld [vmem:[#allocation2] sm:$0xf]
        %v2257 = vld [vmem:[%s559] sm:$0xff]
        %v2258 = vld [vmem:[%s559 + $0x8] sm:$0xff]
        %v2259 = vld [vmem:[%s559 + $0x10] sm:$0xff]
        %v2260 = vld [vmem:[%s559 + $0x18] sm:$0xff]
        %v2261 = vld [vmem:[%s624] sm:$0x3]
        %v2263 = vlaneseq
        %v2264 = vshrl.u32 %v2263, 7
        %v2265 = vsub.s32 0, %v2264
        %v2266 = vrot.slane %v2261, %v2265
        %v2267 = vlaneseq
        %v2268 = vshrl.u32 %v2267, 7
        %v2269 = vsub.s32 1, %v2268
        %v2270 = vrot.slane %v2261, %v2269
        %v2277 = vunpack.c.l.b16 %v2257
        %v2278 = vunpack.c.h.b16 %v2257
        %v2279 = vunpack.c.l.b16 %v2258
        %v2280 = vunpack.c.h.b16 %v2258
        %v2281 = vunpack.c.l.b16 %v2259
        %v2282 = vunpack.c.h.b16 %v2259
        %v2283 = vunpack.c.l.b16 %v2260
        %v2284 = vunpack.c.h.b16 %v2260
        %v2285 = vpack.c.b16 %v2279, %v2277
        %v2286 = vpack.c.b16 %v2280, %v2278
        %v2287 = vpack.c.b16 %v2283, %v2281
        %v2288 = vpack.c.b16 %v2284, %v2282
        %vm2293 = vcmask 261120
        %v2295 = vsel %vm2293, %v2256, 0
        %2297 = vmatprep.subr.bf16.mxu0 0
        %2298 = vmatpush1.bf16.msra.mxu0 0
        %2299 = vmatprep.subr.bf16.mxu0 0
        %2300 = vmatpush1.bf16.msra.mxu0 0
        %2301 = vmatprep.subr.bf16.mxu0 0
        %2302 = vmatpush1.bf16.msra.mxu0 0
        %2303 = vmatprep.subr.bf16.mxu0 0
        %2304 = vmatpush1.bf16.msra.mxu0 0
        %2305 = vmatprep.subr.bf16.mxu0 0
        %2306 = vmatpush1.bf16.msra.mxu0 0
        %2307 = vmatprep.subr.bf16.mxu0 0
        %2308 = vmatpush1.bf16.msra.mxu0 0
        %2309 = vmatprep.subr.bf16.mxu0 %v2288
        %2310 = vmatpush1.bf16.msra.mxu0 %v2287
        %2311 = vmatprep.subr.bf16.mxu0 %v2286
        %2312 = vmatpush1.bf16.msra.mxu0 %v2285
        %2313 = vmatprep.subr.bf16.mxu0 0
        %2314 = vmatpush2.bf16.msra.mxu0 0
        %2315 = vmatprep.subr.bf16.mxu0 0
        %2316 = vmatpush2.bf16.msra.mxu0 0
        %2317 = vmatprep.subr.bf16.mxu0 0
        %2318 = vmatpush2.bf16.msra.mxu0 0
        %2319 = vmatprep.subr.bf16.mxu0 0
        %2320 = vmatpush2.bf16.msra.mxu0 0
        %2321 = vmatprep.subr.bf16.mxu0 0
        %2322 = vmatpush2.bf16.msra.mxu0 0
        %2323 = vmatprep.subr.bf16.mxu0 0
        %2324 = vmatpush2.bf16.msra.mxu0 0
        %2325 = vmatprep.subr.bf16.mxu0 0
        %2326 = vmatpush2.bf16.msra.mxu0 0
        %2327 = vmatprep.subr.bf16.mxu0 0
        %2328 = vmatpush2.bf16.msra.mxu0 0
        %2329 = vmatprep.mubr.bf16.mxu0 0
        %2330 = vmatmul.mubr.bf16.gmra.mxu0 %v2295
        %v2331 = vpop.f32.mrf.mxu0
        %v2332 = vadd.f32 %v2266, %v2331
        %v2333 = vpop.f32.mrf.mxu0
        %v2334 = vadd.f32 %v2270, %v2333
        %v2335 = vpop.f32.mrf.mxu0
        %v2336 = vpop.f32.mrf.mxu0
        %2337 = vdwg.mxu0
        %2338 = vst [vmem:[%s604] sm:$0xff] %v2332
        %2339 = vst [vmem:[%s604 + $0x8] sm:$0xff] %v2334
        %s2340 = sand.u32 %s324, 1
        %s2341 = scalar_lea.sflag [#allocation5], %s2340
        %s2342 = sand.u32 %s324, 1
        %s2343 = smul.addr %s2342, 16
        %s2344 = scalar_lea.vmem [#allocation15], %s2343
        %s2345 = sand.u32 %s36, 1
        %s2346 = scalar_lea.sflag [#allocation17], %s2345
        %s2347 = sand.u32 %s350, 1
        %s2348 = smul.addr %s2347, 8
        %s2349 = scalar_lea.vmem [#allocation16], %s2348
        %s2350 = sand.u32 %s36, 1
        %s2351 = scalar_lea.sflag [#allocation17], %s2350
        %s2352 = sand.u32 %s376, 1
        %s2353 = smul.addr %s2352, 8
        %s2354 = scalar_lea.vmem [#allocation18], %s2353
        // Predicated region
        $region101: #{tpu_custom_call.1} parent=67 // pred_check
          %p2355 = pneg %p334
        $region102: #{tpu_custom_call.1} parent=67 // pred_check_branch
          %2357 = sbr.rel (%p2355) target = $region104
        $region103: #{tpu_custom_call.1} parent=67 // pred_region
          %s2358 = sadd.s32 %s40, %s41
          %s2359 = smul.u32 2, %s2358
          %s2361 = ssub.s32 256, 256
          %2362 = vsyncadd %s2341, %s2361
          %s2363 = smul.addr %s2359, 128
          %s2364 = scalar_lea.hbm %s12, %s2363
          %s2366 = sshll.u32 %s2344, 4
          %s2367 = int_to_ptr.vmem [resolvable:$true] %s2366
          %2369 = dma.vmem_to_hbm [thread:$0]  %s2367, 256, %s2364, %s2341
        $region104: #{tpu_custom_call.1} parent=67 // pred_fallthru
          _
        // Predicated region
        $region105: #{tpu_custom_call.1} parent=67 // pred_check
          %p2370 = pneg %p360
        $region106: #{tpu_custom_call.1} parent=67 // pred_check_branch
          %2372 = sbr.rel (%p2370) target = $region108
        $region107: #{tpu_custom_call.1} parent=67 // pred_region
          %s2374 = ssub.s32 128, 128
          %2375 = vsyncadd %s2346, %s2374
          %s2376 = smul.addr %s40, 128
          %s2377 = scalar_lea.hbm %s13, %s2376
          %s2379 = sshll.u32 %s2349, 4
          %s2380 = int_to_ptr.vmem [resolvable:$true] %s2379
          %2382 = dma.vmem_to_hbm [thread:$0]  %s2380, 128, %s2377, %s2346
        $region108: #{tpu_custom_call.1} parent=67 // pred_fallthru
          _
        // Predicated region
        $region109: #{tpu_custom_call.1} parent=67 // pred_check
          %p2383 = pneg %p386
        $region110: #{tpu_custom_call.1} parent=67 // pred_check_branch
          %2385 = sbr.rel (%p2383) target = $region112
        $region111: #{tpu_custom_call.1} parent=67 // pred_region
          %s2387 = ssub.s32 128, 128
          %2388 = vsyncadd %s2351, %s2387
          %s2389 = smul.addr %s40, 128
          %s2390 = scalar_lea.hbm %s14, %s2389
          %s2392 = sshll.u32 %s2354, 4
          %s2393 = int_to_ptr.vmem [resolvable:$true] %s2392
          %2395 = dma.vmem_to_hbm [thread:$0]  %s2393, 128, %s2390, %s2351
        $region112: #{tpu_custom_call.1} parent=67 // pred_fallthru
          _
      $region68: #{tpu_custom_call.1} parent=5 // pred_fallthru
        _
      %p2396 = scmp.le.s32.totalorder 2, %s31
      // Predicated region
      $region113: #{tpu_custom_call.1} parent=5 // pred_check
        %p2397 = pneg %p2396
      $region114: #{tpu_custom_call.1} parent=5 // pred_check_branch
        %2399 = sbr.rel (%p2397) target = $region116
      $region115: #{tpu_custom_call.1} parent=5 // pred_region
        %s2400 = ssub.s32 %s31, 2
        // Predicated region
        $region117: #{tpu_custom_call.1} parent=115 // pred_check
          %p2401 = pneg %p340
        $region118: #{tpu_custom_call.1} parent=115 // pred_check_branch
          %2403 = sbr.rel (%p2401) target = $region120
        $region119: #{tpu_custom_call.1} parent=115 // pred_region
          %s2404 = sand.u32 %s325, 1
          %s2405 = scalar_lea.sflag [#allocation5], %s2404
          %s2406 = sand.u32 %s325, 1
          %s2407 = smul.addr %s2406, 16
          %s2408 = scalar_lea.vmem [#allocation15], %s2407
          %2409 = dma.done %s2405, 256
        $region120: #{tpu_custom_call.1} parent=115 // pred_fallthru
          _
        // Predicated region
        $region121: #{tpu_custom_call.1} parent=115 // pred_check
          %p2410 = pneg %p366
        $region122: #{tpu_custom_call.1} parent=115 // pred_check_branch
          %2412 = sbr.rel (%p2410) target = $region124
        $region123: #{tpu_custom_call.1} parent=115 // pred_region
          %s2413 = sand.u32 %s37, 1
          %s2414 = scalar_lea.sflag [#allocation17], %s2413
          %s2415 = sand.u32 %s351, 1
          %s2416 = smul.addr %s2415, 8
          %s2417 = scalar_lea.vmem [#allocation16], %s2416
          %2418 = dma.done %s2414, 128
        $region124: #{tpu_custom_call.1} parent=115 // pred_fallthru
          _
        // Predicated region
        $region125: #{tpu_custom_call.1} parent=115 // pred_check
          %p2419 = pneg %p392
        $region126: #{tpu_custom_call.1} parent=115 // pred_check_branch
          %2421 = sbr.rel (%p2419) target = $region128
        $region127: #{tpu_custom_call.1} parent=115 // pred_region
          %s2422 = sand.u32 %s37, 1
          %s2423 = scalar_lea.sflag [#allocation17], %s2422
          %s2424 = sand.u32 %s377, 1
          %s2425 = smul.addr %s2424, 8
          %s2426 = scalar_lea.vmem [#allocation18], %s2425
          %2427 = dma.done %s2423, 128
        $region128: #{tpu_custom_call.1} parent=115 // pred_fallthru
          _
      $region116: #{tpu_custom_call.1} parent=5 // pred_fallthru
        _
    $region6: #{tpu_custom_call.1} parent=1 // loop_footer
      %s35 = sadd.s32 1, %s31
    $region7: #{tpu_custom_call.1} parent=1 // loop_footer_branch
      %30 = sbr.rel target = $region3
    $region8: #{tpu_custom_call.1} parent=1 // loop_exit
      _
    %2428 = vsyncpa [#allocation4], 1
    %s2429 = scalar_lea.sflag [#allocation4], 1
    %2430 = vsyncpa %s2429, 1
    %2431 = vsyncpa [#allocation7], 1
    %2432 = vsyncpa [#allocation10], 1
    %2433 = vsyncpa [#allocation13], 1
    %2434 = vsyncpa [#allocation5], 1
    %s2435 = scalar_lea.sflag [#allocation5], 1
    %2436 = vsyncpa %s2435, 1
    %2437 = vsyncpa [#allocation17], 1
    %s2438 = scalar_lea.sflag [#allocation17], 1
    %2439 = vsyncpa %s2438, 1

</llo_original>
